<compile_context>
chip_gen: v5e
topology: v5e:2x2
jax: 0.10.0
libtpu: 0.0.40
codegen_flags: <defaults>
</compile_context>

<pallas_src>
import functools

import jax
import jax.numpy as jnp
from jax import lax
from jax.experimental import pallas as pl
from jax.experimental.pallas import tpu as pltpu


def _round_up(a, b):
    return -(-a // b) * b


# ---------------------------------------------------------------------------
# Stage 1: fused im2col + Conv2d(KxK, stride 1, SAME) + bias + ReLU.
# One grid step processes TB samples.  Shapes seen by the kernel:
#   x_ref : (1, Cin, L)        L = TB*H*W,  lane = b_local*HW + i*W + j
#   m_ref : (KH*KW, L)         precomputed 0/1 boundary masks (constant)
#   w_ref : (Cout, KH*KW*Cin)  conv weight, row-k order = (ki, kj, cin)
#   b_ref : (Cout, 1)
#   o_ref : (1, Cout, L)
# ---------------------------------------------------------------------------
def _conv_relu_kernel(x_ref, m_ref, w_ref, b_ref, o_ref, *, shifts):
    x = x_ref[0].astype(jnp.float32)                     # (Cin, L), upcast in VMEM
    m_all = m_ref[...]                                   # (KH*KW, L)

    # In-kernel im2col: one lane roll + mask multiply per tap.  Any cyclic wrap
    # (across samples or the block edge) lands only on masked positions, so
    # roll + mask is exact zero-padded convolution (odd kernel, stride 1 only).
    pieces = []
    for t, s in enumerate(shifts):
        if s == 0:                                       # centre tap: identity
            pieces.append(x)
        else:
            rolled = pltpu.roll(x, shift=s, axis=1)
            pieces.append(rolled * m_all[t:t + 1, :])    # (Cin,L) * (1,L)
    patches = jnp.concatenate(pieces, axis=0)            # (KH*KW*Cin, L)

    conv = jnp.dot(w_ref[...], patches, preferred_element_type=jnp.float32)
    o_ref[0] = jnp.maximum(conv + b_ref[...], 0.0).astype(o_ref.dtype)


# ---------------------------------------------------------------------------
# Stage 2: lane-dense fully-connected layer:  (TB, Cout*HW) @ (Cout*HW, 128).
# ---------------------------------------------------------------------------
def _fc_kernel(a_ref, w_ref, b_ref, o_ref):
    acc = jnp.dot(a_ref[...], w_ref[...], preferred_element_type=jnp.float32)
    o_ref[...] = (acc + b_ref[...]).astype(o_ref.dtype)


@functools.partial(jax.jit, static_argnames=("kh", "kw"))
def bio_forward(x, w_mat, conv_b, fc_wp, fc_bp, *, kh, kw):
    N, Cin, H, W = x.shape
    HW = H * W
    Cout, K = w_mat.shape
    Fin, n_pad = fc_wp.shape                              # (Cout*HW, 128)

    # Batch tile: <=64 samples / step keeps VMEM well under the v5e 16 MiB /
    # v7x 32 MiB scoped defaults; grid has >=2 steps (both v7x TCs busy) once
    # N >= 128.
    TB = min(64, _round_up(N, 8))
    N_pad = _round_up(N, TB)
    nb = N_pad // TB
    L = TB * HW

    # Input prep (native dtype; the f32 upcast happens inside the kernel):
    # NCHW -> per-block (Cin, TB*HW) with lane index b_local*HW + p.
    xp = x if N_pad == N else jnp.pad(x, ((0, N_pad - N), (0, 0), (0, 0), (0, 0)))
    xp = xp.reshape(nb, TB, Cin, HW).transpose(0, 2, 1, 3).reshape(nb, Cin, L)

    # Static tap lane-shifts + constant boundary masks (hoisted out of the
    # kernel entirely; under jit these fold to constants).
    p = jnp.arange(HW, dtype=jnp.int32)
    ii, jj = p // W, p % W
    rows, shifts = [], []
    for ki in range(kh):
        for kj in range(kw):
            di, dj = ki - kh // 2, kj - kw // 2
            rows.append((ii + di >= 0) & (ii + di < H) &
                        (jj + dj >= 0) & (jj + dj < W))
            shifts.append((-(di * W + dj)) % L)
    masks = jnp.tile(jnp.stack(rows).astype(jnp.float32), (1, TB))   # (kh*kw, L)

    # ---- Stage 1: im2col + conv + bias + ReLU, TB samples per grid step ----
    act = pl.pallas_call(
        functools.partial(_conv_relu_kernel, shifts=tuple(shifts)),
        out_shape=jax.ShapeDtypeStruct((nb, Cout, L), jnp.float32),
        grid=(nb,),
        in_specs=[
            pl.BlockSpec((1, Cin, L), lambda i: (i, 0, 0)),      # per-block x
            pl.BlockSpec((kh * kw, L), lambda i: (0, 0)),        # masks (const)
            pl.BlockSpec((Cout, K), lambda i: (0, 0)),           # conv weight
            pl.BlockSpec((Cout, 1), lambda i: (0, 0)),           # conv bias
        ],
        out_specs=pl.BlockSpec((1, Cout, L), lambda i: (i, 0, 0)),
        compiler_params=pltpu.CompilerParams(
            dimension_semantics=("parallel",),
            vmem_limit_bytes=32 * 1024 * 1024),
    )(xp, masks, w_mat, conv_b)

    # HBM-level relayout to the NCHW flatten (row = sample, col = c*HW + p).
    # ~16 KB/sample of bandwidth-bound copy; replaces an in-kernel
    # lane<->sublane reshape with uncertain Mosaic support.
    a = act.reshape(nb, Cout, TB, HW).transpose(0, 2, 1, 3).reshape(N_pad, Fin)

    # ---- Stage 2: one lane-dense FC matmul per block, 128-wide output ----
    out = pl.pallas_call(
        _fc_kernel,
        out_shape=jax.ShapeDtypeStruct((N_pad, n_pad), jnp.float32),
        grid=(nb,),
        in_specs=[
            pl.BlockSpec((TB, Fin), lambda i: (i, 0)),           # activations
            pl.BlockSpec((Fin, n_pad), lambda i: (0, 0)),        # fc weight^T (padded)
            pl.BlockSpec((1, n_pad), lambda i: (0, 0)),          # fc bias (padded)
        ],
        out_specs=pl.BlockSpec((TB, n_pad), lambda i: (i, 0)),
        compiler_params=pltpu.CompilerParams(
            dimension_semantics=("parallel",),
            vmem_limit_bytes=32 * 1024 * 1024),
    )(a, fc_wp, fc_bp)
    return out


# ---------------------------------------------------------------------------
# BioModule forward (mode='fa'): identical forward to the wrapped module.
# ---------------------------------------------------------------------------
class BioModulePallas:
    def __init__(self, params, mode="fa"):
        self.mode = mode
        conv_w = jnp.asarray(params["conv_w"], jnp.float32)
        Cout, Cin, KH, KW = conv_w.shape
        # The roll+mask im2col assumes odd kernel, stride 1, SAME padding.
        assert KH % 2 == 1 and KW % 2 == 1, "odd kernel / stride 1 / SAME only"
        self.kh, self.kw = int(KH), int(KW)

        # Fold all layout work into the weights ONCE at init:
        #   conv weight -> (Cout, KH*KW*Cin) matching the kernel's patch order,
        #   fc weight   -> (in_features, 128) transposed + zero-padded so the
        #                  output store is a full-lane (unmasked) store.
        self.w_mat = conv_w.transpose(0, 2, 3, 1).reshape(Cout, KH * KW * Cin)
        self.conv_b = jnp.asarray(params["conv_b"], jnp.float32).reshape(Cout, 1)

        fc_w = jnp.asarray(params["fc_w"], jnp.float32)          # (n_out, Cout*H*W)
        fc_b = jnp.asarray(params["fc_b"], jnp.float32)
        self.n_out = int(fc_w.shape[0])
        n_pad = _round_up(self.n_out, 128)
        self.fc_wp = (jnp.zeros((fc_w.shape[1], n_pad), jnp.float32)
                      .at[:, :self.n_out].set(fc_w.T))
        self.fc_bp = (jnp.zeros((1, n_pad), jnp.float32)
                      .at[0, :self.n_out].set(fc_b))

    def __call__(self, x, targets=None, loss_function=None):
        # 'fa' mode: forward unchanged from the wrapped module.
        # TODO(synk): 'dfa' training-mode loss_gradient attachment is a
        # backward-only autograd hook; forward output is identical, omitted.
        out = bio_forward(x, self.w_mat, self.conv_b, self.fc_wp, self.fc_bp,
                          kh=self.kh, kw=self.kw)
        return out[: x.shape[0], : self.n_out]


def init_params(key):
    """Deterministic, PyTorch-like (uniform fan_in) initialization."""
    k1, k2, k3, k4, k5, k6 = jax.random.split(key, 6)
    Cin, Cout, KH, KW = 4, 8, 3, 3
    H = W = 16
    n_classes = 10
    fan_in_conv = Cin * KH * KW
    bound_c = 1.0 / jnp.sqrt(fan_in_conv)
    conv_w = jax.random.uniform(k1, (Cout, Cin, KH, KW), jnp.float32,
                                -bound_c, bound_c)
    conv_b = jax.random.uniform(k2, (Cout,), jnp.float32, -bound_c, bound_c)
    fan_in_fc = Cout * H * W
    bound_f = 1.0 / jnp.sqrt(fan_in_fc)
    fc_w = jax.random.uniform(k3, (n_classes, fan_in_fc), jnp.float32,
                              -bound_f, bound_f)
    fc_b = jax.random.uniform(k4, (n_classes,), jnp.float32, -bound_f, bound_f)
    # FA feedback (backward) weights: created by the converter but unused in
    # the forward pass -- kept only for structural fidelity.
    conv_w_back = jax.random.uniform(k5, (Cout, Cin, KH, KW), jnp.float32,
                                     -bound_c, bound_c)
    fc_w_back = jax.random.uniform(k6, (n_classes, fan_in_fc), jnp.float32,
                                   -bound_f, bound_f)
    return {
        "conv_w": conv_w, "conv_b": conv_b,
        "fc_w": fc_w, "fc_b": fc_b,
        "conv_w_backward": conv_w_back, "fc_w_backward": fc_w_back,
    }


if __name__ == "__main__":
    key = jax.random.PRNGKey(0)
    kx, kp = jax.random.split(key)

    # Small example input consistent with the module: NCHW (2, 4, 16, 16)
    x = jax.random.normal(kx, (2, 4, 16, 16), dtype=jnp.float32)

    params = init_params(kp)
    bio = BioModulePallas(params, mode="fa")

    out = bio(x)
    out = jax.block_until_ready(out)

    # Reference check in plain JAX (same math: XLA conv + matmul)
    ref_conv = lax.conv_general_dilated(
        x, params["conv_w"], window_strides=(1, 1), padding="SAME",
        dimension_numbers=("NCHW", "OIHW", "NCHW"))
    ref_act = jnp.maximum(ref_conv + params["conv_b"][None, :, None, None], 0.0)
    ref = ref_act.reshape(ref_act.shape[0], -1) @ params["fc_w"].T + params["fc_b"]

    assert out.shape == (2, 10), out.shape
    assert jnp.allclose(out, ref, atol=1e-3, rtol=1e-3), "mismatch vs reference"

    print("KERNEL_OK")
</pallas_src>

<mosaic_0001>
module attributes {stable_mosaic.version = 11 : i64} {
  func.func @_conv_relu_kernel(%arg0: i32, %arg1: memref<1x4x2048xf32, #tpu.memory_space<vmem>>, %arg2: memref<9x2048xf32, #tpu.memory_space<vmem>>, %arg3: memref<8x36xf32, #tpu.memory_space<vmem>>, %arg4: memref<8x1xf32, #tpu.memory_space<vmem>>, %arg5: memref<1x8x2048xf32, #tpu.memory_space<vmem>>) attributes {dimension_semantics = [#tpu.dimension_semantics<parallel>], iteration_bounds = array<i64: 1>, scalar_prefetch = 0 : i64, scratch_operands = 0 : i64, tpu.core_type = #tpu.core_type<tc>, window_params = [{transform_indices = @transform_0, window_bounds = array<i64: 1, 4, 2048>}, {pipeline_mode = #tpu.pipeline_mode<synchronous>, transform_indices = @transform_1, window_bounds = array<i64: 9, 2048>}, {pipeline_mode = #tpu.pipeline_mode<synchronous>, transform_indices = @transform_2, window_bounds = array<i64: 8, 36>}, {pipeline_mode = #tpu.pipeline_mode<synchronous>, transform_indices = @transform_3, window_bounds = array<i64: 8, 1>}, {transform_indices = @transform_4, window_bounds = array<i64: 1, 8, 2048>}]} {
    %c0 = arith.constant 0 : index
    %c0_0 = arith.constant 0 : index
    %c0_1 = arith.constant 0 : index
    %0 = vector.load %arg1[%c0, %c0_0, %c0_1] : memref<1x4x2048xf32, #tpu.memory_space<vmem>>, vector<1x4x2048xf32>
    %1 = vector.shape_cast %0 : vector<1x4x2048xf32> to vector<4x2048xf32>
    %c0_2 = arith.constant 0 : index
    %c0_3 = arith.constant 0 : index
    %2 = vector.load %arg2[%c0_2, %c0_3] : memref<9x2048xf32, #tpu.memory_space<vmem>>, vector<9x2048xf32>
    %c17_i32 = arith.constant 17 : i32
    %3 = tpu.dynamic_rotate %1 by %c17_i32 dim 1 : vector<4x2048xf32>, i32 -> vector<4x2048xf32>
    %4 = vector.extract_strided_slice %2 {offsets = [0, 0], sizes = [1, 2048], strides = [1, 1]} : vector<9x2048xf32> to vector<1x2048xf32>
    %5 = vector.broadcast %4 : vector<1x2048xf32> to vector<4x2048xf32>
    %6 = arith.mulf %3, %5 : vector<4x2048xf32>
    %c16_i32 = arith.constant 16 : i32
    %7 = tpu.dynamic_rotate %1 by %c16_i32 dim 1 : vector<4x2048xf32>, i32 -> vector<4x2048xf32>
    %8 = vector.extract_strided_slice %2 {offsets = [1, 0], sizes = [1, 2048], strides = [1, 1]} : vector<9x2048xf32> to vector<1x2048xf32>
    %9 = vector.broadcast %8 : vector<1x2048xf32> to vector<4x2048xf32>
    %10 = arith.mulf %7, %9 : vector<4x2048xf32>
    %c15_i32 = arith.constant 15 : i32
    %11 = tpu.dynamic_rotate %1 by %c15_i32 dim 1 : vector<4x2048xf32>, i32 -> vector<4x2048xf32>
    %12 = vector.extract_strided_slice %2 {offsets = [2, 0], sizes = [1, 2048], strides = [1, 1]} : vector<9x2048xf32> to vector<1x2048xf32>
    %13 = vector.broadcast %12 : vector<1x2048xf32> to vector<4x2048xf32>
    %14 = arith.mulf %11, %13 : vector<4x2048xf32>
    %c1_i32 = arith.constant 1 : i32
    %15 = tpu.dynamic_rotate %1 by %c1_i32 dim 1 : vector<4x2048xf32>, i32 -> vector<4x2048xf32>
    %16 = vector.extract_strided_slice %2 {offsets = [3, 0], sizes = [1, 2048], strides = [1, 1]} : vector<9x2048xf32> to vector<1x2048xf32>
    %17 = vector.broadcast %16 : vector<1x2048xf32> to vector<4x2048xf32>
    %18 = arith.mulf %15, %17 : vector<4x2048xf32>
    %c2047_i32 = arith.constant 2047 : i32
    %19 = tpu.dynamic_rotate %1 by %c2047_i32 dim 1 : vector<4x2048xf32>, i32 -> vector<4x2048xf32>
    %20 = vector.extract_strided_slice %2 {offsets = [5, 0], sizes = [1, 2048], strides = [1, 1]} : vector<9x2048xf32> to vector<1x2048xf32>
    %21 = vector.broadcast %20 : vector<1x2048xf32> to vector<4x2048xf32>
    %22 = arith.mulf %19, %21 : vector<4x2048xf32>
    %c2033_i32 = arith.constant 2033 : i32
    %23 = tpu.dynamic_rotate %1 by %c2033_i32 dim 1 : vector<4x2048xf32>, i32 -> vector<4x2048xf32>
    %24 = vector.extract_strided_slice %2 {offsets = [6, 0], sizes = [1, 2048], strides = [1, 1]} : vector<9x2048xf32> to vector<1x2048xf32>
    %25 = vector.broadcast %24 : vector<1x2048xf32> to vector<4x2048xf32>
    %26 = arith.mulf %23, %25 : vector<4x2048xf32>
    %c2032_i32 = arith.constant 2032 : i32
    %27 = tpu.dynamic_rotate %1 by %c2032_i32 dim 1 : vector<4x2048xf32>, i32 -> vector<4x2048xf32>
    %28 = vector.extract_strided_slice %2 {offsets = [7, 0], sizes = [1, 2048], strides = [1, 1]} : vector<9x2048xf32> to vector<1x2048xf32>
    %29 = vector.broadcast %28 : vector<1x2048xf32> to vector<4x2048xf32>
    %30 = arith.mulf %27, %29 : vector<4x2048xf32>
    %c2031_i32 = arith.constant 2031 : i32
    %31 = tpu.dynamic_rotate %1 by %c2031_i32 dim 1 : vector<4x2048xf32>, i32 -> vector<4x2048xf32>
    %32 = vector.extract_strided_slice %2 {offsets = [8, 0], sizes = [1, 2048], strides = [1, 1]} : vector<9x2048xf32> to vector<1x2048xf32>
    %33 = vector.broadcast %32 : vector<1x2048xf32> to vector<4x2048xf32>
    %34 = arith.mulf %31, %33 : vector<4x2048xf32>
    %35 = tpu.concatenate %6, %10, %14, %18, %1, %22, %26, %30, %34 in 0 : vector<4x2048xf32>, vector<4x2048xf32>, vector<4x2048xf32>, vector<4x2048xf32>, vector<4x2048xf32>, vector<4x2048xf32>, vector<4x2048xf32>, vector<4x2048xf32>, vector<4x2048xf32> -> vector<36x2048xf32>
    %c0_4 = arith.constant 0 : index
    %c0_5 = arith.constant 0 : index
    %36 = vector.load %arg3[%c0_4, %c0_5] : memref<8x36xf32, #tpu.memory_space<vmem>>, vector<8x36xf32>
    %cst = arith.constant dense<0.000000e+00> : vector<8x2048xf32>
    %37 = tpu.matmul %36, %35, %cst {dimension_numbers = #tpu.dot_dimension_numbers<[1], [0], [0], [1], [0, 0, 1, 1], [], []>} : vector<8x36xf32>, vector<36x2048xf32>, vector<8x2048xf32> -> vector<8x2048xf32>
    %c0_6 = arith.constant 0 : index
    %c0_7 = arith.constant 0 : index
    %38 = vector.load %arg4[%c0_6, %c0_7] : memref<8x1xf32, #tpu.memory_space<vmem>>, vector<8x1xf32>
    %39 = vector.broadcast %38 : vector<8x1xf32> to vector<8x2048xf32>
    %40 = arith.addf %37, %39 : vector<8x2048xf32>
    %cst_8 = arith.constant 0.000000e+00 : f32
    %41 = vector.broadcast %cst_8 : f32 to vector<8x2048xf32>
    %42 = arith.maximumf %40, %41 : vector<8x2048xf32>
    %c0_9 = arith.constant 0 : index
    %c0_10 = arith.constant 0 : index
    %c0_11 = arith.constant 0 : index
    %43 = vector.load %arg5[%c0_9, %c0_10, %c0_11] : memref<1x8x2048xf32, #tpu.memory_space<vmem>>, vector<1x8x2048xf32>
    %44 = vector.shape_cast %43 : vector<1x8x2048xf32> to vector<8x2048xf32>
    %45 = vector.shape_cast %42 : vector<8x2048xf32> to vector<1x8x2048xf32>
    tpu.vector_store %arg5[%c0_9, %c0_10, %c0_11], %45 {strides = array<i32>} : memref<1x8x2048xf32, #tpu.memory_space<vmem>>, vector<1x8x2048xf32>,
    return
  }
  func.func @transform_0(%arg0: i32) -> (i32, i32, i32) {
    %c0_i32 = arith.constant 0 : i32
    %c0_i32_0 = arith.constant 0 : i32
    %c0_i32_1 = arith.constant 0 : i32
    return %arg0, %c0_i32, %c0_i32_0 : i32, i32, i32
  }
  func.func @transform_1(%arg0: i32) -> (i32, i32) {
    %c0_i32 = arith.constant 0 : i32
    %c0_i32_0 = arith.constant 0 : i32
    %c0_i32_1 = arith.constant 0 : i32
    return %c0_i32, %c0_i32_0 : i32, i32
  }
  func.func @transform_2(%arg0: i32) -> (i32, i32) {
    %c0_i32 = arith.constant 0 : i32
    %c0_i32_0 = arith.constant 0 : i32
    %c0_i32_1 = arith.constant 0 : i32
    return %c0_i32, %c0_i32_0 : i32, i32
  }
  func.func @transform_3(%arg0: i32) -> (i32, i32) {
    %c0_i32 = arith.constant 0 : i32
    %c0_i32_0 = arith.constant 0 : i32
    %c0_i32_1 = arith.constant 0 : i32
    return %c0_i32, %c0_i32_0 : i32, i32
  }
  func.func @transform_4(%arg0: i32) -> (i32, i32, i32) {
    %c0_i32 = arith.constant 0 : i32
    %c0_i32_0 = arith.constant 0 : i32
    %c0_i32_1 = arith.constant 0 : i32
    return %arg0, %c0_i32, %c0_i32_0 : i32, i32, i32
  }
}

module attributes {stable_mosaic.version = 11 : i64} {
  func.func @_fc_kernel(%arg0: i32, %arg1: memref<8x2048xf32, #tpu.memory_space<vmem>>, %arg2: memref<2048x128xf32, #tpu.memory_space<vmem>>, %arg3: memref<1x128xf32, #tpu.memory_space<vmem>>, %arg4: memref<8x128xf32, #tpu.memory_space<vmem>>) attributes {dimension_semantics = [#tpu.dimension_semantics<parallel>], iteration_bounds = array<i64: 1>, scalar_prefetch = 0 : i64, scratch_operands = 0 : i64, tpu.core_type = #tpu.core_type<tc>, window_params = [{transform_indices = @transform_0, window_bounds = array<i64: 8, 2048>}, {pipeline_mode = #tpu.pipeline_mode<synchronous>, transform_indices = @transform_1, window_bounds = array<i64: 2048, 128>}, {pipeline_mode = #tpu.pipeline_mode<synchronous>, transform_indices = @transform_2, window_bounds = array<i64: 1, 128>}, {transform_indices = @transform_3, window_bounds = array<i64: 8, 128>}]} {
    %c0 = arith.constant 0 : index
    %c0_0 = arith.constant 0 : index
    %0 = vector.load %arg1[%c0, %c0_0] : memref<8x2048xf32, #tpu.memory_space<vmem>>, vector<8x2048xf32>
    %c0_1 = arith.constant 0 : index
    %c0_2 = arith.constant 0 : index
    %1 = vector.load %arg2[%c0_1, %c0_2] : memref<2048x128xf32, #tpu.memory_space<vmem>>, vector<2048x128xf32>
    %cst = arith.constant dense<0.000000e+00> : vector<8x128xf32>
    %2 = tpu.matmul %0, %1, %cst {dimension_numbers = #tpu.dot_dimension_numbers<[1], [0], [0], [1], [0, 0, 1, 1], [], []>} : vector<8x2048xf32>, vector<2048x128xf32>, vector<8x128xf32> -> vector<8x128xf32>
    %c0_3 = arith.constant 0 : index
    %c0_4 = arith.constant 0 : index
    %3 = vector.load %arg3[%c0_3, %c0_4] : memref<1x128xf32, #tpu.memory_space<vmem>>, vector<1x128xf32>
    %4 = vector.broadcast %3 : vector<1x128xf32> to vector<8x128xf32>
    %5 = arith.addf %2, %4 : vector<8x128xf32>
    %c0_5 = arith.constant 0 : index
    %c0_6 = arith.constant 0 : index
    %6 = vector.load %arg4[%c0_5, %c0_6] : memref<8x128xf32, #tpu.memory_space<vmem>>, vector<8x128xf32>
    tpu.vector_store %arg4[%c0_5, %c0_6], %5 {strides = array<i32>} : memref<8x128xf32, #tpu.memory_space<vmem>>, vector<8x128xf32>,
    return
  }
  func.func @transform_0(%arg0: i32) -> (i32, i32) {
    %c0_i32 = arith.constant 0 : i32
    %c0_i32_0 = arith.constant 0 : i32
    return %arg0, %c0_i32 : i32, i32
  }
  func.func @transform_1(%arg0: i32) -> (i32, i32) {
    %c0_i32 = arith.constant 0 : i32
    %c0_i32_0 = arith.constant 0 : i32
    %c0_i32_1 = arith.constant 0 : i32
    return %c0_i32, %c0_i32_0 : i32, i32
  }
  func.func @transform_2(%arg0: i32) -> (i32, i32) {
    %c0_i32 = arith.constant 0 : i32
    %c0_i32_0 = arith.constant 0 : i32
    %c0_i32_1 = arith.constant 0 : i32
    return %c0_i32, %c0_i32_0 : i32, i32
  }
  func.func @transform_3(%arg0: i32) -> (i32, i32) {
    %c0_i32 = arith.constant 0 : i32
    %c0_i32_0 = arith.constant 0 : i32
    return %arg0, %c0_i32 : i32, i32
  }
}

</mosaic_0001>

<llo_original>
// kernel: bio_forward.3
$region0: #{bio_forward.3}
  #allocation0 [shape = 'u32[]', space=smem, size = 0x4, offset = 0x4, fixed_abs, tag = 'smem constant byte address 0x4 - core index']
  #allocation1 [shape = 'u32[72,128]{1,0:T(1,128)}', space=vmem, size = 0x9000, scoped, tag = 'internal scratch']
  %s0 = inlined_call_operand.vmem [shape: f32[8,2048], index: 0, kind: input, shape index: {}]
  %s1 = inlined_call_operand.vmem [shape: f32[2048,128], index: 1, kind: input, shape index: {}]
  %s2 = inlined_call_operand.vmem [shape: f32[1,128], index: 2, kind: input, shape index: {}]
  %s3 = inlined_call_operand.hbm [shape: f32[8,128], index: 3, kind: output, shape index: {}]
  %s4 = sld [smem:[#allocation0]]
  $region22: #{bio_forward.3} parent=0
    _
  %s6 = ssub.s32 1, %s4
  %s7 = scalar_select 0, %s6, %s4
  $region1: #{bio_forward.3} parent=0
    #allocation2 [shape = 'u8[4096]{0}', space=vmem, size = 0x1000, scoped, tag = 'output window, operand 0, single buffered']
    #allocation3 [shape = 's32[1]{0}', space=sflag, size = 0x4, scoped, tag = 'scoped memory for bio_forward.3']
    %8 = vsyncpa [#allocation3], 0
    // Predicated region
    $region2: #{bio_forward.3} parent=1 // pred_check
      _
    $region3: #{bio_forward.3} parent=1 // pred_check_branch
      %10 = sbr.rel (0) target = $region5
    $region4: #{bio_forward.3} parent=1 // pred_region
      _
    $region5: #{bio_forward.3} parent=1 // pred_fallthru
      _
    // Predicated region
    $region6: #{bio_forward.3} parent=1 // pred_check
      _
    $region7: #{bio_forward.3} parent=1 // pred_check_branch
      %12 = sbr.rel (0) target = $region9
    $region8: #{bio_forward.3} parent=1 // pred_region
      _
    $region9: #{bio_forward.3} parent=1 // pred_fallthru
      _
    // Predicated region
    $region10: #{bio_forward.3} parent=1 // pred_check
      _
    $region11: #{bio_forward.3} parent=1 // pred_check_branch
      %14 = sbr.rel (0) target = $region13
    $region12: #{bio_forward.3} parent=1 // pred_region
      _
    $region13: #{bio_forward.3} parent=1 // pred_fallthru
      _
    %v15 = vld [vmem:[%s0] sm:$0xff]
    %v16 = vld [vmem:[%s0 + $0x8] sm:$0xff]
    %v17 = vld [vmem:[%s0 + $0x10] sm:$0xff]
    %v18 = vld [vmem:[%s0 + $0x18] sm:$0xff]
    %v19 = vld [vmem:[%s0 + $0x20] sm:$0xff]
    %v20 = vld [vmem:[%s0 + $0x28] sm:$0xff]
    %v21 = vld [vmem:[%s0 + $0x30] sm:$0xff]
    %v22 = vld [vmem:[%s0 + $0x38] sm:$0xff]
    %v23 = vld [vmem:[%s0 + $0x40] sm:$0xff]
    %v24 = vld [vmem:[%s0 + $0x48] sm:$0xff]
    %v25 = vld [vmem:[%s0 + $0x50] sm:$0xff]
    %v26 = vld [vmem:[%s0 + $0x58] sm:$0xff]
    %v27 = vld [vmem:[%s0 + $0x60] sm:$0xff]
    %v28 = vld [vmem:[%s0 + $0x68] sm:$0xff]
    %v29 = vld [vmem:[%s0 + $0x70] sm:$0xff]
    %v30 = vld [vmem:[%s0 + $0x78] sm:$0xff]
    %v31 = vld [vmem:[%s1] sm:$0xff]
    %v32 = vld [vmem:[%s1 + $0x8] sm:$0xff]
    %v33 = vld [vmem:[%s1 + $0x10] sm:$0xff]
    %v34 = vld [vmem:[%s1 + $0x18] sm:$0xff]
    %v35 = vld [vmem:[%s1 + $0x20] sm:$0xff]
    %v36 = vld [vmem:[%s1 + $0x28] sm:$0xff]
    %v37 = vld [vmem:[%s1 + $0x30] sm:$0xff]
    %v38 = vld [vmem:[%s1 + $0x38] sm:$0xff]
    %v39 = vld [vmem:[%s1 + $0x40] sm:$0xff]
    %v40 = vld [vmem:[%s1 + $0x48] sm:$0xff]
    %v41 = vld [vmem:[%s1 + $0x50] sm:$0xff]
    %v42 = vld [vmem:[%s1 + $0x58] sm:$0xff]
    %v43 = vld [vmem:[%s1 + $0x60] sm:$0xff]
    %v44 = vld [vmem:[%s1 + $0x68] sm:$0xff]
    %v45 = vld [vmem:[%s1 + $0x70] sm:$0xff]
    %v46 = vld [vmem:[%s1 + $0x78] sm:$0xff]
    %v47 = vld [vmem:[%s1 + $0x80] sm:$0xff]
    %v48 = vld [vmem:[%s1 + $0x88] sm:$0xff]
    %v49 = vld [vmem:[%s1 + $0x90] sm:$0xff]
    %v50 = vld [vmem:[%s1 + $0x98] sm:$0xff]
    %v51 = vld [vmem:[%s1 + $0xa0] sm:$0xff]
    %v52 = vld [vmem:[%s1 + $0xa8] sm:$0xff]
    %v53 = vld [vmem:[%s1 + $0xb0] sm:$0xff]
    %v54 = vld [vmem:[%s1 + $0xb8] sm:$0xff]
    %v55 = vld [vmem:[%s1 + $0xc0] sm:$0xff]
    %v56 = vld [vmem:[%s1 + $0xc8] sm:$0xff]
    %v57 = vld [vmem:[%s1 + $0xd0] sm:$0xff]
    %v58 = vld [vmem:[%s1 + $0xd8] sm:$0xff]
    %v59 = vld [vmem:[%s1 + $0xe0] sm:$0xff]
    %v60 = vld [vmem:[%s1 + $0xe8] sm:$0xff]
    %v61 = vld [vmem:[%s1 + $0xf0] sm:$0xff]
    %v62 = vld [vmem:[%s1 + $0xf8] sm:$0xff]
    %v63 = vld [vmem:[%s1 + $0x100] sm:$0xff]
    %v64 = vld [vmem:[%s1 + $0x108] sm:$0xff]
    %v65 = vld [vmem:[%s1 + $0x110] sm:$0xff]
    %v66 = vld [vmem:[%s1 + $0x118] sm:$0xff]
    %v67 = vld [vmem:[%s1 + $0x120] sm:$0xff]
    %v68 = vld [vmem:[%s1 + $0x128] sm:$0xff]
    %v69 = vld [vmem:[%s1 + $0x130] sm:$0xff]
    %v70 = vld [vmem:[%s1 + $0x138] sm:$0xff]
    %v71 = vld [vmem:[%s1 + $0x140] sm:$0xff]
    %v72 = vld [vmem:[%s1 + $0x148] sm:$0xff]
    %v73 = vld [vmem:[%s1 + $0x150] sm:$0xff]
    %v74 = vld [vmem:[%s1 + $0x158] sm:$0xff]
    %v75 = vld [vmem:[%s1 + $0x160] sm:$0xff]
    %v76 = vld [vmem:[%s1 + $0x168] sm:$0xff]
    %v77 = vld [vmem:[%s1 + $0x170] sm:$0xff]
    %v78 = vld [vmem:[%s1 + $0x178] sm:$0xff]
    %v79 = vld [vmem:[%s1 + $0x180] sm:$0xff]
    %v80 = vld [vmem:[%s1 + $0x188] sm:$0xff]
    %v81 = vld [vmem:[%s1 + $0x190] sm:$0xff]
    %v82 = vld [vmem:[%s1 + $0x198] sm:$0xff]
    %v83 = vld [vmem:[%s1 + $0x1a0] sm:$0xff]
    %v84 = vld [vmem:[%s1 + $0x1a8] sm:$0xff]
    %v85 = vld [vmem:[%s1 + $0x1b0] sm:$0xff]
    %v86 = vld [vmem:[%s1 + $0x1b8] sm:$0xff]
    %v87 = vld [vmem:[%s1 + $0x1c0] sm:$0xff]
    %v88 = vld [vmem:[%s1 + $0x1c8] sm:$0xff]
    %v89 = vld [vmem:[%s1 + $0x1d0] sm:$0xff]
    %v90 = vld [vmem:[%s1 + $0x1d8] sm:$0xff]
    %v91 = vld [vmem:[%s1 + $0x1e0] sm:$0xff]
    %v92 = vld [vmem:[%s1 + $0x1e8] sm:$0xff]
    %v93 = vld [vmem:[%s1 + $0x1f0] sm:$0xff]
    %v94 = vld [vmem:[%s1 + $0x1f8] sm:$0xff]
    %v95 = vld [vmem:[%s1 + $0x200] sm:$0xff]
    %v96 = vld [vmem:[%s1 + $0x208] sm:$0xff]
    %v97 = vld [vmem:[%s1 + $0x210] sm:$0xff]
    %v98 = vld [vmem:[%s1 + $0x218] sm:$0xff]
    %v99 = vld [vmem:[%s1 + $0x220] sm:$0xff]
    %v100 = vld [vmem:[%s1 + $0x228] sm:$0xff]
    %v101 = vld [vmem:[%s1 + $0x230] sm:$0xff]
    %v102 = vld [vmem:[%s1 + $0x238] sm:$0xff]
    %v103 = vld [vmem:[%s1 + $0x240] sm:$0xff]
    %v104 = vld [vmem:[%s1 + $0x248] sm:$0xff]
    %v105 = vld [vmem:[%s1 + $0x250] sm:$0xff]
    %v106 = vld [vmem:[%s1 + $0x258] sm:$0xff]
    %v107 = vld [vmem:[%s1 + $0x260] sm:$0xff]
    %v108 = vld [vmem:[%s1 + $0x268] sm:$0xff]
    %v109 = vld [vmem:[%s1 + $0x270] sm:$0xff]
    %v110 = vld [vmem:[%s1 + $0x278] sm:$0xff]
    %v111 = vld [vmem:[%s1 + $0x280] sm:$0xff]
    %v112 = vld [vmem:[%s1 + $0x288] sm:$0xff]
    %v113 = vld [vmem:[%s1 + $0x290] sm:$0xff]
    %v114 = vld [vmem:[%s1 + $0x298] sm:$0xff]
    %v115 = vld [vmem:[%s1 + $0x2a0] sm:$0xff]
    %v116 = vld [vmem:[%s1 + $0x2a8] sm:$0xff]
    %v117 = vld [vmem:[%s1 + $0x2b0] sm:$0xff]
    %v118 = vld [vmem:[%s1 + $0x2b8] sm:$0xff]
    %v119 = vld [vmem:[%s1 + $0x2c0] sm:$0xff]
    %v120 = vld [vmem:[%s1 + $0x2c8] sm:$0xff]
    %v121 = vld [vmem:[%s1 + $0x2d0] sm:$0xff]
    %v122 = vld [vmem:[%s1 + $0x2d8] sm:$0xff]
    %v123 = vld [vmem:[%s1 + $0x2e0] sm:$0xff]
    %v124 = vld [vmem:[%s1 + $0x2e8] sm:$0xff]
    %v125 = vld [vmem:[%s1 + $0x2f0] sm:$0xff]
    %v126 = vld [vmem:[%s1 + $0x2f8] sm:$0xff]
    %v127 = vld [vmem:[%s1 + $0x300] sm:$0xff]
    %v128 = vld [vmem:[%s1 + $0x308] sm:$0xff]
    %v129 = vld [vmem:[%s1 + $0x310] sm:$0xff]
    %v130 = vld [vmem:[%s1 + $0x318] sm:$0xff]
    %v131 = vld [vmem:[%s1 + $0x320] sm:$0xff]
    %v132 = vld [vmem:[%s1 + $0x328] sm:$0xff]
    %v133 = vld [vmem:[%s1 + $0x330] sm:$0xff]
    %v134 = vld [vmem:[%s1 + $0x338] sm:$0xff]
    %v135 = vld [vmem:[%s1 + $0x340] sm:$0xff]
    %v136 = vld [vmem:[%s1 + $0x348] sm:$0xff]
    %v137 = vld [vmem:[%s1 + $0x350] sm:$0xff]
    %v138 = vld [vmem:[%s1 + $0x358] sm:$0xff]
    %v139 = vld [vmem:[%s1 + $0x360] sm:$0xff]
    %v140 = vld [vmem:[%s1 + $0x368] sm:$0xff]
    %v141 = vld [vmem:[%s1 + $0x370] sm:$0xff]
    %v142 = vld [vmem:[%s1 + $0x378] sm:$0xff]
    %v143 = vld [vmem:[%s1 + $0x380] sm:$0xff]
    %v144 = vld [vmem:[%s1 + $0x388] sm:$0xff]
    %v145 = vld [vmem:[%s1 + $0x390] sm:$0xff]
    %v146 = vld [vmem:[%s1 + $0x398] sm:$0xff]
    %v147 = vld [vmem:[%s1 + $0x3a0] sm:$0xff]
    %v148 = vld [vmem:[%s1 + $0x3a8] sm:$0xff]
    %v149 = vld [vmem:[%s1 + $0x3b0] sm:$0xff]
    %v150 = vld [vmem:[%s1 + $0x3b8] sm:$0xff]
    %v151 = vld [vmem:[%s1 + $0x3c0] sm:$0xff]
    %v152 = vld [vmem:[%s1 + $0x3c8] sm:$0xff]
    %v153 = vld [vmem:[%s1 + $0x3d0] sm:$0xff]
    %v154 = vld [vmem:[%s1 + $0x3d8] sm:$0xff]
    %v155 = vld [vmem:[%s1 + $0x3e0] sm:$0xff]
    %v156 = vld [vmem:[%s1 + $0x3e8] sm:$0xff]
    %v157 = vld [vmem:[%s1 + $0x3f0] sm:$0xff]
    %v158 = vld [vmem:[%s1 + $0x3f8] sm:$0xff]
    %v159 = vld [vmem:[%s1 + $0x400] sm:$0xff]
    %v160 = vld [vmem:[%s1 + $0x408] sm:$0xff]
    %v161 = vld [vmem:[%s1 + $0x410] sm:$0xff]
    %v162 = vld [vmem:[%s1 + $0x418] sm:$0xff]
    %v163 = vld [vmem:[%s1 + $0x420] sm:$0xff]
    %v164 = vld [vmem:[%s1 + $0x428] sm:$0xff]
    %v165 = vld [vmem:[%s1 + $0x430] sm:$0xff]
    %v166 = vld [vmem:[%s1 + $0x438] sm:$0xff]
    %v167 = vld [vmem:[%s1 + $0x440] sm:$0xff]
    %v168 = vld [vmem:[%s1 + $0x448] sm:$0xff]
    %v169 = vld [vmem:[%s1 + $0x450] sm:$0xff]
    %v170 = vld [vmem:[%s1 + $0x458] sm:$0xff]
    %v171 = vld [vmem:[%s1 + $0x460] sm:$0xff]
    %v172 = vld [vmem:[%s1 + $0x468] sm:$0xff]
    %v173 = vld [vmem:[%s1 + $0x470] sm:$0xff]
    %v174 = vld [vmem:[%s1 + $0x478] sm:$0xff]
    %v175 = vld [vmem:[%s1 + $0x480] sm:$0xff]
    %v176 = vld [vmem:[%s1 + $0x488] sm:$0xff]
    %v177 = vld [vmem:[%s1 + $0x490] sm:$0xff]
    %v178 = vld [vmem:[%s1 + $0x498] sm:$0xff]
    %v179 = vld [vmem:[%s1 + $0x4a0] sm:$0xff]
    %v180 = vld [vmem:[%s1 + $0x4a8] sm:$0xff]
    %v181 = vld [vmem:[%s1 + $0x4b0] sm:$0xff]
    %v182 = vld [vmem:[%s1 + $0x4b8] sm:$0xff]
    %v183 = vld [vmem:[%s1 + $0x4c0] sm:$0xff]
    %v184 = vld [vmem:[%s1 + $0x4c8] sm:$0xff]
    %v185 = vld [vmem:[%s1 + $0x4d0] sm:$0xff]
    %v186 = vld [vmem:[%s1 + $0x4d8] sm:$0xff]
    %v187 = vld [vmem:[%s1 + $0x4e0] sm:$0xff]
    %v188 = vld [vmem:[%s1 + $0x4e8] sm:$0xff]
    %v189 = vld [vmem:[%s1 + $0x4f0] sm:$0xff]
    %v190 = vld [vmem:[%s1 + $0x4f8] sm:$0xff]
    %v191 = vld [vmem:[%s1 + $0x500] sm:$0xff]
    %v192 = vld [vmem:[%s1 + $0x508] sm:$0xff]
    %v193 = vld [vmem:[%s1 + $0x510] sm:$0xff]
    %v194 = vld [vmem:[%s1 + $0x518] sm:$0xff]
    %v195 = vld [vmem:[%s1 + $0x520] sm:$0xff]
    %v196 = vld [vmem:[%s1 + $0x528] sm:$0xff]
    %v197 = vld [vmem:[%s1 + $0x530] sm:$0xff]
    %v198 = vld [vmem:[%s1 + $0x538] sm:$0xff]
    %v199 = vld [vmem:[%s1 + $0x540] sm:$0xff]
    %v200 = vld [vmem:[%s1 + $0x548] sm:$0xff]
    %v201 = vld [vmem:[%s1 + $0x550] sm:$0xff]
    %v202 = vld [vmem:[%s1 + $0x558] sm:$0xff]
    %v203 = vld [vmem:[%s1 + $0x560] sm:$0xff]
    %v204 = vld [vmem:[%s1 + $0x568] sm:$0xff]
    %v205 = vld [vmem:[%s1 + $0x570] sm:$0xff]
    %v206 = vld [vmem:[%s1 + $0x578] sm:$0xff]
    %v207 = vld [vmem:[%s1 + $0x580] sm:$0xff]
    %v208 = vld [vmem:[%s1 + $0x588] sm:$0xff]
    %v209 = vld [vmem:[%s1 + $0x590] sm:$0xff]
    %v210 = vld [vmem:[%s1 + $0x598] sm:$0xff]
    %v211 = vld [vmem:[%s1 + $0x5a0] sm:$0xff]
    %v212 = vld [vmem:[%s1 + $0x5a8] sm:$0xff]
    %v213 = vld [vmem:[%s1 + $0x5b0] sm:$0xff]
    %v214 = vld [vmem:[%s1 + $0x5b8] sm:$0xff]
    %v215 = vld [vmem:[%s1 + $0x5c0] sm:$0xff]
    %v216 = vld [vmem:[%s1 + $0x5c8] sm:$0xff]
    %v217 = vld [vmem:[%s1 + $0x5d0] sm:$0xff]
    %v218 = vld [vmem:[%s1 + $0x5d8] sm:$0xff]
    %v219 = vld [vmem:[%s1 + $0x5e0] sm:$0xff]
    %v220 = vld [vmem:[%s1 + $0x5e8] sm:$0xff]
    %v221 = vld [vmem:[%s1 + $0x5f0] sm:$0xff]
    %v222 = vld [vmem:[%s1 + $0x5f8] sm:$0xff]
    %v223 = vld [vmem:[%s1 + $0x600] sm:$0xff]
    %v224 = vld [vmem:[%s1 + $0x608] sm:$0xff]
    %v225 = vld [vmem:[%s1 + $0x610] sm:$0xff]
    %v226 = vld [vmem:[%s1 + $0x618] sm:$0xff]
    %v227 = vld [vmem:[%s1 + $0x620] sm:$0xff]
    %v228 = vld [vmem:[%s1 + $0x628] sm:$0xff]
    %v229 = vld [vmem:[%s1 + $0x630] sm:$0xff]
    %v230 = vld [vmem:[%s1 + $0x638] sm:$0xff]
    %v231 = vld [vmem:[%s1 + $0x640] sm:$0xff]
    %v232 = vld [vmem:[%s1 + $0x648] sm:$0xff]
    %v233 = vld [vmem:[%s1 + $0x650] sm:$0xff]
    %v234 = vld [vmem:[%s1 + $0x658] sm:$0xff]
    %v235 = vld [vmem:[%s1 + $0x660] sm:$0xff]
    %v236 = vld [vmem:[%s1 + $0x668] sm:$0xff]
    %v237 = vld [vmem:[%s1 + $0x670] sm:$0xff]
    %v238 = vld [vmem:[%s1 + $0x678] sm:$0xff]
    %v239 = vld [vmem:[%s1 + $0x680] sm:$0xff]
    %v240 = vld [vmem:[%s1 + $0x688] sm:$0xff]
    %v241 = vld [vmem:[%s1 + $0x690] sm:$0xff]
    %v242 = vld [vmem:[%s1 + $0x698] sm:$0xff]
    %v243 = vld [vmem:[%s1 + $0x6a0] sm:$0xff]
    %v244 = vld [vmem:[%s1 + $0x6a8] sm:$0xff]
    %v245 = vld [vmem:[%s1 + $0x6b0] sm:$0xff]
    %v246 = vld [vmem:[%s1 + $0x6b8] sm:$0xff]
    %v247 = vld [vmem:[%s1 + $0x6c0] sm:$0xff]
    %v248 = vld [vmem:[%s1 + $0x6c8] sm:$0xff]
    %v249 = vld [vmem:[%s1 + $0x6d0] sm:$0xff]
    %v250 = vld [vmem:[%s1 + $0x6d8] sm:$0xff]
    %v251 = vld [vmem:[%s1 + $0x6e0] sm:$0xff]
    %v252 = vld [vmem:[%s1 + $0x6e8] sm:$0xff]
    %v253 = vld [vmem:[%s1 + $0x6f0] sm:$0xff]
    %v254 = vld [vmem:[%s1 + $0x6f8] sm:$0xff]
    %v255 = vld [vmem:[%s1 + $0x700] sm:$0xff]
    %v256 = vld [vmem:[%s1 + $0x708] sm:$0xff]
    %v257 = vld [vmem:[%s1 + $0x710] sm:$0xff]
    %v258 = vld [vmem:[%s1 + $0x718] sm:$0xff]
    %v259 = vld [vmem:[%s1 + $0x720] sm:$0xff]
    %v260 = vld [vmem:[%s1 + $0x728] sm:$0xff]
    %v261 = vld [vmem:[%s1 + $0x730] sm:$0xff]
    %v262 = vld [vmem:[%s1 + $0x738] sm:$0xff]
    %v263 = vld [vmem:[%s1 + $0x740] sm:$0xff]
    %v264 = vld [vmem:[%s1 + $0x748] sm:$0xff]
    %v265 = vld [vmem:[%s1 + $0x750] sm:$0xff]
    %v266 = vld [vmem:[%s1 + $0x758] sm:$0xff]
    %v267 = vld [vmem:[%s1 + $0x760] sm:$0xff]
    %v268 = vld [vmem:[%s1 + $0x768] sm:$0xff]
    %v269 = vld [vmem:[%s1 + $0x770] sm:$0xff]
    %v270 = vld [vmem:[%s1 + $0x778] sm:$0xff]
    %v271 = vld [vmem:[%s1 + $0x780] sm:$0xff]
    %v272 = vld [vmem:[%s1 + $0x788] sm:$0xff]
    %v273 = vld [vmem:[%s1 + $0x790] sm:$0xff]
    %v274 = vld [vmem:[%s1 + $0x798] sm:$0xff]
    %v275 = vld [vmem:[%s1 + $0x7a0] sm:$0xff]
    %v276 = vld [vmem:[%s1 + $0x7a8] sm:$0xff]
    %v277 = vld [vmem:[%s1 + $0x7b0] sm:$0xff]
    %v278 = vld [vmem:[%s1 + $0x7b8] sm:$0xff]
    %v279 = vld [vmem:[%s1 + $0x7c0] sm:$0xff]
    %v280 = vld [vmem:[%s1 + $0x7c8] sm:$0xff]
    %v281 = vld [vmem:[%s1 + $0x7d0] sm:$0xff]
    %v282 = vld [vmem:[%s1 + $0x7d8] sm:$0xff]
    %v283 = vld [vmem:[%s1 + $0x7e0] sm:$0xff]
    %v284 = vld [vmem:[%s1 + $0x7e8] sm:$0xff]
    %v285 = vld [vmem:[%s1 + $0x7f0] sm:$0xff]
    %v286 = vld [vmem:[%s1 + $0x7f8] sm:$0xff]
    %v287 = vld [vmem:[%s2] sm:$0x1]
    %v289 = vperm.slane %v287, 0
    %291 = vmatpush.msra.mxu0 %v46
    %292 = vmatpush.msra.mxu0 %v45
    %293 = vmatpush.msra.mxu0 %v44
    %294 = vmatpush.msra.mxu0 %v43
    %295 = vmatpush.msra.mxu0 %v42
    %296 = vmatpush.msra.mxu0 %v41
    %297 = vmatpush.msra.mxu0 %v40
    %298 = vmatpush.msra.mxu0 %v39
    %299 = vmatpush.msra.mxu0 %v38
    %300 = vmatpush.msra.mxu0 %v37
    %301 = vmatpush.msra.mxu0 %v36
    %302 = vmatpush.msra.mxu0 %v35
    %303 = vmatpush.msra.mxu0 %v34
    %304 = vmatpush.msra.mxu0 %v33
    %305 = vmatpush.msra.mxu0 %v32
    %306 = vmatpush.msra.mxu0 %v31
    %307 = vmatmul.f32.gmra.mxu0 %v15
    %v308 = vpop.f32.mrf.mxu0
    %v309 = vadd.f32 %v289, %v308
    %310 = vdwg.mxu0
    %311 = vmatpush.msra.mxu0 %v62
    %312 = vmatpush.msra.mxu0 %v61
    %313 = vmatpush.msra.mxu0 %v60
    %314 = vmatpush.msra.mxu0 %v59
    %315 = vmatpush.msra.mxu0 %v58
    %316 = vmatpush.msra.mxu0 %v57
    %317 = vmatpush.msra.mxu0 %v56
    %318 = vmatpush.msra.mxu0 %v55
    %319 = vmatpush.msra.mxu0 %v54
    %320 = vmatpush.msra.mxu0 %v53
    %321 = vmatpush.msra.mxu0 %v52
    %322 = vmatpush.msra.mxu0 %v51
    %323 = vmatpush.msra.mxu0 %v50
    %324 = vmatpush.msra.mxu0 %v49
    %325 = vmatpush.msra.mxu0 %v48
    %326 = vmatpush.msra.mxu0 %v47
    %327 = vmatmul.f32.gmra.mxu0 %v16
    %v328 = vpop.f32.mrf.mxu0
    %v329 = vadd.f32 %v309, %v328
    %330 = vdwg.mxu0
    %331 = vmatpush.msra.mxu0 %v78
    %332 = vmatpush.msra.mxu0 %v77
    %333 = vmatpush.msra.mxu0 %v76
    %334 = vmatpush.msra.mxu0 %v75
    %335 = vmatpush.msra.mxu0 %v74
    %336 = vmatpush.msra.mxu0 %v73
    %337 = vmatpush.msra.mxu0 %v72
    %338 = vmatpush.msra.mxu0 %v71
    %339 = vmatpush.msra.mxu0 %v70
    %340 = vmatpush.msra.mxu0 %v69
    %341 = vmatpush.msra.mxu0 %v68
    %342 = vmatpush.msra.mxu0 %v67
    %343 = vmatpush.msra.mxu0 %v66
    %344 = vmatpush.msra.mxu0 %v65
    %345 = vmatpush.msra.mxu0 %v64
    %346 = vmatpush.msra.mxu0 %v63
    %347 = vmatmul.f32.gmra.mxu0 %v17
    %v348 = vpop.f32.mrf.mxu0
    %v349 = vadd.f32 %v329, %v348
    %350 = vdwg.mxu0
    %351 = vmatpush.msra.mxu0 %v94
    %352 = vmatpush.msra.mxu0 %v93
    %353 = vmatpush.msra.mxu0 %v92
    %354 = vmatpush.msra.mxu0 %v91
    %355 = vmatpush.msra.mxu0 %v90
    %356 = vmatpush.msra.mxu0 %v89
    %357 = vmatpush.msra.mxu0 %v88
    %358 = vmatpush.msra.mxu0 %v87
    %359 = vmatpush.msra.mxu0 %v86
    %360 = vmatpush.msra.mxu0 %v85
    %361 = vmatpush.msra.mxu0 %v84
    %362 = vmatpush.msra.mxu0 %v83
    %363 = vmatpush.msra.mxu0 %v82
    %364 = vmatpush.msra.mxu0 %v81
    %365 = vmatpush.msra.mxu0 %v80
    %366 = vmatpush.msra.mxu0 %v79
    %367 = vmatmul.f32.gmra.mxu0 %v18
    %v368 = vpop.f32.mrf.mxu0
    %v369 = vadd.f32 %v349, %v368
    %370 = vdwg.mxu0
    %371 = vmatpush.msra.mxu0 %v110
    %372 = vmatpush.msra.mxu0 %v109
    %373 = vmatpush.msra.mxu0 %v108
    %374 = vmatpush.msra.mxu0 %v107
    %375 = vmatpush.msra.mxu0 %v106
    %376 = vmatpush.msra.mxu0 %v105
    %377 = vmatpush.msra.mxu0 %v104
    %378 = vmatpush.msra.mxu0 %v103
    %379 = vmatpush.msra.mxu0 %v102
    %380 = vmatpush.msra.mxu0 %v101
    %381 = vmatpush.msra.mxu0 %v100
    %382 = vmatpush.msra.mxu0 %v99
    %383 = vmatpush.msra.mxu0 %v98
    %384 = vmatpush.msra.mxu0 %v97
    %385 = vmatpush.msra.mxu0 %v96
    %386 = vmatpush.msra.mxu0 %v95
    %387 = vmatmul.f32.gmra.mxu0 %v19
    %v388 = vpop.f32.mrf.mxu0
    %v389 = vadd.f32 %v369, %v388
    %390 = vdwg.mxu0
    %391 = vmatpush.msra.mxu0 %v126
    %392 = vmatpush.msra.mxu0 %v125
    %393 = vmatpush.msra.mxu0 %v124
    %394 = vmatpush.msra.mxu0 %v123
    %395 = vmatpush.msra.mxu0 %v122
    %396 = vmatpush.msra.mxu0 %v121
    %397 = vmatpush.msra.mxu0 %v120
    %398 = vmatpush.msra.mxu0 %v119
    %399 = vmatpush.msra.mxu0 %v118
    %400 = vmatpush.msra.mxu0 %v117
    %401 = vmatpush.msra.mxu0 %v116
    %402 = vmatpush.msra.mxu0 %v115
    %403 = vmatpush.msra.mxu0 %v114
    %404 = vmatpush.msra.mxu0 %v113
    %405 = vmatpush.msra.mxu0 %v112
    %406 = vmatpush.msra.mxu0 %v111
    %407 = vmatmul.f32.gmra.mxu0 %v20
    %v408 = vpop.f32.mrf.mxu0
    %v409 = vadd.f32 %v389, %v408
    %410 = vdwg.mxu0
    %411 = vmatpush.msra.mxu0 %v142
    %412 = vmatpush.msra.mxu0 %v141
    %413 = vmatpush.msra.mxu0 %v140
    %414 = vmatpush.msra.mxu0 %v139
    %415 = vmatpush.msra.mxu0 %v138
    %416 = vmatpush.msra.mxu0 %v137
    %417 = vmatpush.msra.mxu0 %v136
    %418 = vmatpush.msra.mxu0 %v135
    %419 = vmatpush.msra.mxu0 %v134
    %420 = vmatpush.msra.mxu0 %v133
    %421 = vmatpush.msra.mxu0 %v132
    %422 = vmatpush.msra.mxu0 %v131
    %423 = vmatpush.msra.mxu0 %v130
    %424 = vmatpush.msra.mxu0 %v129
    %425 = vmatpush.msra.mxu0 %v128
    %426 = vmatpush.msra.mxu0 %v127
    %427 = vmatmul.f32.gmra.mxu0 %v21
    %v428 = vpop.f32.mrf.mxu0
    %v429 = vadd.f32 %v409, %v428
    %430 = vdwg.mxu0
    %431 = vmatpush.msra.mxu0 %v158
    %432 = vmatpush.msra.mxu0 %v157
    %433 = vmatpush.msra.mxu0 %v156
    %434 = vmatpush.msra.mxu0 %v155
    %435 = vmatpush.msra.mxu0 %v154
    %436 = vmatpush.msra.mxu0 %v153
    %437 = vmatpush.msra.mxu0 %v152
    %438 = vmatpush.msra.mxu0 %v151
    %439 = vmatpush.msra.mxu0 %v150
    %440 = vmatpush.msra.mxu0 %v149
    %441 = vmatpush.msra.mxu0 %v148
    %442 = vmatpush.msra.mxu0 %v147
    %443 = vmatpush.msra.mxu0 %v146
    %444 = vmatpush.msra.mxu0 %v145
    %445 = vmatpush.msra.mxu0 %v144
    %446 = vmatpush.msra.mxu0 %v143
    %447 = vmatmul.f32.gmra.mxu0 %v22
    %v448 = vpop.f32.mrf.mxu0
    %v449 = vadd.f32 %v429, %v448
    %450 = vdwg.mxu0
    %451 = vmatpush.msra.mxu0 %v174
    %452 = vmatpush.msra.mxu0 %v173
    %453 = vmatpush.msra.mxu0 %v172
    %454 = vmatpush.msra.mxu0 %v171
    %455 = vmatpush.msra.mxu0 %v170
    %456 = vmatpush.msra.mxu0 %v169
    %457 = vmatpush.msra.mxu0 %v168
    %458 = vmatpush.msra.mxu0 %v167
    %459 = vmatpush.msra.mxu0 %v166
    %460 = vmatpush.msra.mxu0 %v165
    %461 = vmatpush.msra.mxu0 %v164
    %462 = vmatpush.msra.mxu0 %v163
    %463 = vmatpush.msra.mxu0 %v162
    %464 = vmatpush.msra.mxu0 %v161
    %465 = vmatpush.msra.mxu0 %v160
    %466 = vmatpush.msra.mxu0 %v159
    %467 = vmatmul.f32.gmra.mxu0 %v23
    %v468 = vpop.f32.mrf.mxu0
    %v469 = vadd.f32 %v449, %v468
    %470 = vdwg.mxu0
    %471 = vmatpush.msra.mxu0 %v190
    %472 = vmatpush.msra.mxu0 %v189
    %473 = vmatpush.msra.mxu0 %v188
    %474 = vmatpush.msra.mxu0 %v187
    %475 = vmatpush.msra.mxu0 %v186
    %476 = vmatpush.msra.mxu0 %v185
    %477 = vmatpush.msra.mxu0 %v184
    %478 = vmatpush.msra.mxu0 %v183
    %479 = vmatpush.msra.mxu0 %v182
    %480 = vmatpush.msra.mxu0 %v181
    %481 = vmatpush.msra.mxu0 %v180
    %482 = vmatpush.msra.mxu0 %v179
    %483 = vmatpush.msra.mxu0 %v178
    %484 = vmatpush.msra.mxu0 %v177
    %485 = vmatpush.msra.mxu0 %v176
    %486 = vmatpush.msra.mxu0 %v175
    %487 = vmatmul.f32.gmra.mxu0 %v24
    %v488 = vpop.f32.mrf.mxu0
    %v489 = vadd.f32 %v469, %v488
    %490 = vdwg.mxu0
    %491 = vmatpush.msra.mxu0 %v206
    %492 = vmatpush.msra.mxu0 %v205
    %493 = vmatpush.msra.mxu0 %v204
    %494 = vmatpush.msra.mxu0 %v203
    %495 = vmatpush.msra.mxu0 %v202
    %496 = vmatpush.msra.mxu0 %v201
    %497 = vmatpush.msra.mxu0 %v200
    %498 = vmatpush.msra.mxu0 %v199
    %499 = vmatpush.msra.mxu0 %v198
    %500 = vmatpush.msra.mxu0 %v197
    %501 = vmatpush.msra.mxu0 %v196
    %502 = vmatpush.msra.mxu0 %v195
    %503 = vmatpush.msra.mxu0 %v194
    %504 = vmatpush.msra.mxu0 %v193
    %505 = vmatpush.msra.mxu0 %v192
    %506 = vmatpush.msra.mxu0 %v191
    %507 = vmatmul.f32.gmra.mxu0 %v25
    %v508 = vpop.f32.mrf.mxu0
    %v509 = vadd.f32 %v489, %v508
    %510 = vdwg.mxu0
    %511 = vmatpush.msra.mxu0 %v222
    %512 = vmatpush.msra.mxu0 %v221
    %513 = vmatpush.msra.mxu0 %v220
    %514 = vmatpush.msra.mxu0 %v219
    %515 = vmatpush.msra.mxu0 %v218
    %516 = vmatpush.msra.mxu0 %v217
    %517 = vmatpush.msra.mxu0 %v216
    %518 = vmatpush.msra.mxu0 %v215
    %519 = vmatpush.msra.mxu0 %v214
    %520 = vmatpush.msra.mxu0 %v213
    %521 = vmatpush.msra.mxu0 %v212
    %522 = vmatpush.msra.mxu0 %v211
    %523 = vmatpush.msra.mxu0 %v210
    %524 = vmatpush.msra.mxu0 %v209
    %525 = vmatpush.msra.mxu0 %v208
    %526 = vmatpush.msra.mxu0 %v207
    %527 = vmatmul.f32.gmra.mxu0 %v26
    %v528 = vpop.f32.mrf.mxu0
    %v529 = vadd.f32 %v509, %v528
    %530 = vdwg.mxu0
    %531 = vmatpush.msra.mxu0 %v238
    %532 = vmatpush.msra.mxu0 %v237
    %533 = vmatpush.msra.mxu0 %v236
    %534 = vmatpush.msra.mxu0 %v235
    %535 = vmatpush.msra.mxu0 %v234
    %536 = vmatpush.msra.mxu0 %v233
    %537 = vmatpush.msra.mxu0 %v232
    %538 = vmatpush.msra.mxu0 %v231
    %539 = vmatpush.msra.mxu0 %v230
    %540 = vmatpush.msra.mxu0 %v229
    %541 = vmatpush.msra.mxu0 %v228
    %542 = vmatpush.msra.mxu0 %v227
    %543 = vmatpush.msra.mxu0 %v226
    %544 = vmatpush.msra.mxu0 %v225
    %545 = vmatpush.msra.mxu0 %v224
    %546 = vmatpush.msra.mxu0 %v223
    %547 = vmatmul.f32.gmra.mxu0 %v27
    %v548 = vpop.f32.mrf.mxu0
    %v549 = vadd.f32 %v529, %v548
    %550 = vdwg.mxu0
    %551 = vmatpush.msra.mxu0 %v254
    %552 = vmatpush.msra.mxu0 %v253
    %553 = vmatpush.msra.mxu0 %v252
    %554 = vmatpush.msra.mxu0 %v251
    %555 = vmatpush.msra.mxu0 %v250
    %556 = vmatpush.msra.mxu0 %v249
    %557 = vmatpush.msra.mxu0 %v248
    %558 = vmatpush.msra.mxu0 %v247
    %559 = vmatpush.msra.mxu0 %v246
    %560 = vmatpush.msra.mxu0 %v245
    %561 = vmatpush.msra.mxu0 %v244
    %562 = vmatpush.msra.mxu0 %v243
    %563 = vmatpush.msra.mxu0 %v242
    %564 = vmatpush.msra.mxu0 %v241
    %565 = vmatpush.msra.mxu0 %v240
    %566 = vmatpush.msra.mxu0 %v239
    %567 = vmatmul.f32.gmra.mxu0 %v28
    %v568 = vpop.f32.mrf.mxu0
    %v569 = vadd.f32 %v549, %v568
    %570 = vdwg.mxu0
    %571 = vmatpush.msra.mxu0 %v270
    %572 = vmatpush.msra.mxu0 %v269
    %573 = vmatpush.msra.mxu0 %v268
    %574 = vmatpush.msra.mxu0 %v267
    %575 = vmatpush.msra.mxu0 %v266
    %576 = vmatpush.msra.mxu0 %v265
    %577 = vmatpush.msra.mxu0 %v264
    %578 = vmatpush.msra.mxu0 %v263
    %579 = vmatpush.msra.mxu0 %v262
    %580 = vmatpush.msra.mxu0 %v261
    %581 = vmatpush.msra.mxu0 %v260
    %582 = vmatpush.msra.mxu0 %v259
    %583 = vmatpush.msra.mxu0 %v258
    %584 = vmatpush.msra.mxu0 %v257
    %585 = vmatpush.msra.mxu0 %v256
    %586 = vmatpush.msra.mxu0 %v255
    %587 = vmatmul.f32.gmra.mxu0 %v29
    %v588 = vpop.f32.mrf.mxu0
    %v589 = vadd.f32 %v569, %v588
    %590 = vdwg.mxu0
    %591 = vmatpush.msra.mxu0 %v286
    %592 = vmatpush.msra.mxu0 %v285
    %593 = vmatpush.msra.mxu0 %v284
    %594 = vmatpush.msra.mxu0 %v283
    %595 = vmatpush.msra.mxu0 %v282
    %596 = vmatpush.msra.mxu0 %v281
    %597 = vmatpush.msra.mxu0 %v280
    %598 = vmatpush.msra.mxu0 %v279
    %599 = vmatpush.msra.mxu0 %v278
    %600 = vmatpush.msra.mxu0 %v277
    %601 = vmatpush.msra.mxu0 %v276
    %602 = vmatpush.msra.mxu0 %v275
    %603 = vmatpush.msra.mxu0 %v274
    %604 = vmatpush.msra.mxu0 %v273
    %605 = vmatpush.msra.mxu0 %v272
    %606 = vmatpush.msra.mxu0 %v271
    %607 = vmatmul.f32.gmra.mxu0 %v30
    %v608 = vpop.f32.mrf.mxu0
    %v609 = vadd.f32 %v589, %v608
    %610 = vdwg.mxu0
    %611 = vst [vmem:[#allocation2] sm:$0xff] %v609
    // Predicated region
    $region14: #{bio_forward.3} parent=1 // pred_check
      _
    $region15: #{bio_forward.3} parent=1 // pred_check_branch
      %613 = sbr.rel (0) target = $region17
    $region16: #{bio_forward.3} parent=1 // pred_region
      %615 = vsyncadd [#allocation3], 0
      %s617 = sshll.u32 [#allocation2], 4
      %s618 = int_to_ptr.vmem [resolvable:$true] %s617
      %s619 = sshll.u32 %s3, 4
      %s620 = int_to_ptr.hbm [resolvable:$true] %s619
      %622 = dma.vmem_to_hbm [thread:$0]  %s618, 128, %s620, [#allocation3]
    $region17: #{bio_forward.3} parent=1 // pred_fallthru
      _
    // Predicated region
    $region18: #{bio_forward.3} parent=1 // pred_check
      _
    $region19: #{bio_forward.3} parent=1 // pred_check_branch
      %624 = sbr.rel (0) target = $region21
    $region20: #{bio_forward.3} parent=1 // pred_region
      %626 = dma.done [#allocation3], 128
    $region21: #{bio_forward.3} parent=1 // pred_fallthru
      _
    %627 = vsyncpa [#allocation3], 1

// kernel: bio_forward.2
$region0: #{bio_forward.2}
  #allocation0 [shape = 'u32[]', space=smem, size = 0x4, offset = 0x4, fixed_abs, tag = 'smem constant byte address 0x4 - core index']
  #allocation1 [shape = 'u32[72,128]{1,0:T(1,128)}', space=vmem, size = 0x9000, scoped, tag = 'internal scratch']
  %s0 = inlined_call_operand.vmem [shape: f32[1,4,2048], index: 0, kind: input, shape index: {}]
  %s1 = inlined_call_operand.vmem [shape: f32[9,2048], index: 1, kind: input, shape index: {}]
  %s2 = inlined_call_operand.vmem [shape: f32[8,36], index: 2, kind: input, shape index: {}]
  %s3 = inlined_call_operand.vmem [shape: f32[8,1], index: 3, kind: input, shape index: {}]
  %s4 = inlined_call_operand.vmem [shape: f32[1,8,2048], index: 4, kind: output, shape index: {}]
  %s5 = sld [smem:[#allocation0]]
  $region26: #{bio_forward.2} parent=0
    _
  %s7 = ssub.s32 1, %s5
  %s8 = scalar_select 0, %s7, %s5
  // Predicated region
  $region2: #{bio_forward.2} parent=0 // pred_check
    _
  $region3: #{bio_forward.2} parent=0 // pred_check_branch
    %10 = sbr.rel (0) target = $region5
  $region4: #{bio_forward.2} parent=0 // pred_region
    _
  $region5: #{bio_forward.2} parent=0 // pred_fallthru
    _
  // Predicated region
  $region6: #{bio_forward.2} parent=0 // pred_check
    _
  $region7: #{bio_forward.2} parent=0 // pred_check_branch
    %12 = sbr.rel (0) target = $region9
  $region8: #{bio_forward.2} parent=0 // pred_region
    _
  $region9: #{bio_forward.2} parent=0 // pred_fallthru
    _
  // Predicated region
  $region10: #{bio_forward.2} parent=0 // pred_check
    _
  $region11: #{bio_forward.2} parent=0 // pred_check_branch
    %14 = sbr.rel (0) target = $region13
  $region12: #{bio_forward.2} parent=0 // pred_region
    _
  $region13: #{bio_forward.2} parent=0 // pred_fallthru
    _
  // Predicated region
  $region14: #{bio_forward.2} parent=0 // pred_check
    _
  $region15: #{bio_forward.2} parent=0 // pred_check_branch
    %16 = sbr.rel (0) target = $region17
  $region16: #{bio_forward.2} parent=0 // pred_region
    _
  $region17: #{bio_forward.2} parent=0 // pred_fallthru
    _
  %v17 = vld [vmem:[%s0] sm:$0xff]
  %v18 = vld [vmem:[%s0 + $0x8] sm:$0xff]
  %v19 = vld [vmem:[%s0 + $0x10] sm:$0xff]
  %v20 = vld [vmem:[%s0 + $0x18] sm:$0xff]
  %v21 = vld [vmem:[%s0 + $0x20] sm:$0xff]
  %v22 = vld [vmem:[%s0 + $0x28] sm:$0xff]
  %v23 = vld [vmem:[%s0 + $0x30] sm:$0xff]
  %v24 = vld [vmem:[%s0 + $0x38] sm:$0xff]
  %v25 = vld [vmem:[%s1] sm:$0xff]
  %v26 = vld [vmem:[%s1 + $0x8] sm:$0xff]
  %v27 = vld [vmem:[%s1 + $0x10] sm:$0xff]
  %v28 = vld [vmem:[%s1 + $0x18] sm:$0xff]
  %v29 = vld [vmem:[%s1 + $0x20] sm:$0xff]
  %v30 = vld [vmem:[%s1 + $0x28] sm:$0xff]
  %v31 = vld [vmem:[%s1 + $0x30] sm:$0xff]
  %v32 = vld [vmem:[%s1 + $0x38] sm:$0xff]
  %v33 = vld [vmem:[%s1 + $0x40] sm:$0xff]
  %v34 = vld [vmem:[%s1 + $0x48] sm:$0xff]
  %v35 = vld [vmem:[%s1 + $0x50] sm:$0xff]
  %v36 = vld [vmem:[%s1 + $0x58] sm:$0xff]
  %v37 = vld [vmem:[%s1 + $0x60] sm:$0xff]
  %v38 = vld [vmem:[%s1 + $0x68] sm:$0xff]
  %v39 = vld [vmem:[%s1 + $0x70] sm:$0xff]
  %v40 = vld [vmem:[%s1 + $0x78] sm:$0xff]
  %v41 = vld [vmem:[%s1 + $0x80] sm:$0x1]
  %v42 = vld [vmem:[%s1 + $0x88] sm:$0x1]
  %v43 = vld [vmem:[%s1 + $0x90] sm:$0x1]
  %v44 = vld [vmem:[%s1 + $0x98] sm:$0x1]
  %v45 = vld [vmem:[%s1 + $0xa0] sm:$0x1]
  %v46 = vld [vmem:[%s1 + $0xa8] sm:$0x1]
  %v47 = vld [vmem:[%s1 + $0xb0] sm:$0x1]
  %v48 = vld [vmem:[%s1 + $0xb8] sm:$0x1]
  %v49 = vld [vmem:[%s1 + $0xc0] sm:$0x1]
  %v50 = vld [vmem:[%s1 + $0xc8] sm:$0x1]
  %v51 = vld [vmem:[%s1 + $0xd0] sm:$0x1]
  %v52 = vld [vmem:[%s1 + $0xd8] sm:$0x1]
  %v53 = vld [vmem:[%s1 + $0xe0] sm:$0x1]
  %v54 = vld [vmem:[%s1 + $0xe8] sm:$0x1]
  %v55 = vld [vmem:[%s1 + $0xf0] sm:$0x1]
  %v56 = vld [vmem:[%s1 + $0xf8] sm:$0x1]
  %65 = vst [vmem:[#allocation1] ss:$2 sm:$0xff] %v17
  %s66 = scalar_lea.vmem [#allocation1], 16
  %67 = vst [vmem:[%s66] ss:$2 sm:$0xff] %v18
  %s68 = scalar_lea.vmem [#allocation1], 32
  %69 = vst [vmem:[%s68] ss:$2 sm:$0xff] %v19
  %s70 = scalar_lea.vmem [#allocation1], 48
  %71 = vst [vmem:[%s70] ss:$2 sm:$0xff] %v20
  %v72 = vld.sshfl [vmem:[#allocation1] sm:$0xff pattern:$0x75316420]
  %v73 = vld.sshfl [vmem:[#allocation1 + $0x8] sm:$0xff pattern:$0x75316420]
  %v74 = vld.sshfl [vmem:[#allocation1 + $0x10] sm:$0xff pattern:$0x75316420]
  %v75 = vld.sshfl [vmem:[#allocation1 + $0x18] sm:$0xff pattern:$0x75316420]
  %v76 = vld.sshfl [vmem:[#allocation1 + $0x20] sm:$0xff pattern:$0x75316420]
  %v77 = vld.sshfl [vmem:[#allocation1 + $0x28] sm:$0xff pattern:$0x75316420]
  %v78 = vld.sshfl [vmem:[#allocation1 + $0x30] sm:$0xff pattern:$0x75316420]
  %v79 = vld.sshfl [vmem:[#allocation1 + $0x38] sm:$0xff pattern:$0x75316420]
  %80 = vst [vmem:[#allocation1] ss:$2 sm:$0xff] %v21
  %81 = vst [vmem:[%s66] ss:$2 sm:$0xff] %v22
  %82 = vst [vmem:[%s68] ss:$2 sm:$0xff] %v23
  %83 = vst [vmem:[%s70] ss:$2 sm:$0xff] %v24
  %v84 = vld.sshfl [vmem:[#allocation1] sm:$0xff pattern:$0x75316420]
  %v85 = vld.sshfl [vmem:[#allocation1 + $0x8] sm:$0xff pattern:$0x75316420]
  %v86 = vld.sshfl [vmem:[#allocation1 + $0x10] sm:$0xff pattern:$0x75316420]
  %v87 = vld.sshfl [vmem:[#allocation1 + $0x18] sm:$0xff pattern:$0x75316420]
  %v88 = vld.sshfl [vmem:[#allocation1 + $0x20] sm:$0xff pattern:$0x75316420]
  %v89 = vld.sshfl [vmem:[#allocation1 + $0x28] sm:$0xff pattern:$0x75316420]
  %v90 = vld.sshfl [vmem:[#allocation1 + $0x30] sm:$0xff pattern:$0x75316420]
  %v91 = vld.sshfl [vmem:[#allocation1 + $0x38] sm:$0xff pattern:$0x75316420]
  %108 = vrot.lane.b32.xlu0 %v72, 17
  %v109 = vpop.permute.xlu0 %108
  %110 = vrot.lane.b32.xlu0 %v73, 17
  %v111 = vpop.permute.xlu0 %110
  %112 = vrot.lane.b32.xlu0 %v74, 17
  %v113 = vpop.permute.xlu0 %112
  %114 = vrot.lane.b32.xlu0 %v75, 17
  %v115 = vpop.permute.xlu0 %114
  %116 = vrot.lane.b32.xlu0 %v76, 17
  %v117 = vpop.permute.xlu0 %116
  %118 = vrot.lane.b32.xlu0 %v77, 17
  %v119 = vpop.permute.xlu0 %118
  %120 = vrot.lane.b32.xlu0 %v78, 17
  %v121 = vpop.permute.xlu0 %120
  %122 = vrot.lane.b32.xlu0 %v79, 17
  %v123 = vpop.permute.xlu0 %122
  %124 = vrot.lane.b32.xlu0 %v84, 17
  %v125 = vpop.permute.xlu0 %124
  %126 = vrot.lane.b32.xlu0 %v85, 17
  %v127 = vpop.permute.xlu0 %126
  %128 = vrot.lane.b32.xlu0 %v86, 17
  %v129 = vpop.permute.xlu0 %128
  %130 = vrot.lane.b32.xlu0 %v87, 17
  %v131 = vpop.permute.xlu0 %130
  %132 = vrot.lane.b32.xlu0 %v88, 17
  %v133 = vpop.permute.xlu0 %132
  %134 = vrot.lane.b32.xlu0 %v89, 17
  %v135 = vpop.permute.xlu0 %134
  %136 = vrot.lane.b32.xlu0 %v90, 17
  %v137 = vpop.permute.xlu0 %136
  %138 = vrot.lane.b32.xlu0 %v91, 17
  %v139 = vpop.permute.xlu0 %138
  %v140 = vlaneseq
  %v141 = vand.u32 %v140, 127
  %vm142 = vcmp.lt.s32.totalorder %v141, 17
  %v143 = vsel %vm142, %v137, %v139
  %v144 = vsel %vm142, %v135, %v137
  %v145 = vsel %vm142, %v133, %v135
  %v146 = vsel %vm142, %v131, %v133
  %v147 = vsel %vm142, %v129, %v131
  %v148 = vsel %vm142, %v127, %v129
  %v149 = vsel %vm142, %v125, %v127
  %v150 = vsel %vm142, %v123, %v125
  %v151 = vsel %vm142, %v121, %v123
  %v152 = vsel %vm142, %v119, %v121
  %v153 = vsel %vm142, %v117, %v119
  %v154 = vsel %vm142, %v115, %v117
  %v155 = vsel %vm142, %v113, %v115
  %v156 = vsel %vm142, %v111, %v113
  %v157 = vsel %vm142, %v109, %v111
  %v158 = vsel %vm142, %v139, %v109
  %v159 = vperm.slane %v25, 0
  %v160 = vperm.slane %v26, 0
  %v161 = vperm.slane %v27, 0
  %v162 = vperm.slane %v28, 0
  %v163 = vperm.slane %v29, 0
  %v164 = vperm.slane %v30, 0
  %v165 = vperm.slane %v31, 0
  %v166 = vperm.slane %v32, 0
  %v167 = vperm.slane %v33, 0
  %v168 = vperm.slane %v34, 0
  %v169 = vperm.slane %v35, 0
  %v170 = vperm.slane %v36, 0
  %v171 = vperm.slane %v37, 0
  %v172 = vperm.slane %v38, 0
  %v173 = vperm.slane %v39, 0
  %v174 = vperm.slane %v40, 0
  %v175 = vmul.f32 %v158, %v159
  %v176 = vmul.f32 %v157, %v160
  %v177 = vmul.f32 %v156, %v161
  %v178 = vmul.f32 %v155, %v162
  %v179 = vmul.f32 %v154, %v163
  %v180 = vmul.f32 %v153, %v164
  %v181 = vmul.f32 %v152, %v165
  %v182 = vmul.f32 %v151, %v166
  %v183 = vmul.f32 %v150, %v167
  %v184 = vmul.f32 %v149, %v168
  %v185 = vmul.f32 %v148, %v169
  %v186 = vmul.f32 %v147, %v170
  %v187 = vmul.f32 %v146, %v171
  %v188 = vmul.f32 %v145, %v172
  %v189 = vmul.f32 %v144, %v173
  %v190 = vmul.f32 %v143, %v174
  %191 = vst [vmem:[#allocation1] ss:$2 sm:$0xff] %v17
  %s192 = scalar_lea.vmem [#allocation1], 16
  %193 = vst [vmem:[%s192] ss:$2 sm:$0xff] %v18
  %s194 = scalar_lea.vmem [#allocation1], 32
  %195 = vst [vmem:[%s194] ss:$2 sm:$0xff] %v19
  %s196 = scalar_lea.vmem [#allocation1], 48
  %197 = vst [vmem:[%s196] ss:$2 sm:$0xff] %v20
  %v198 = vld.sshfl [vmem:[#allocation1] sm:$0xff pattern:$0x75316420]
  %v199 = vld.sshfl [vmem:[#allocation1 + $0x8] sm:$0xff pattern:$0x75316420]
  %v200 = vld.sshfl [vmem:[#allocation1 + $0x10] sm:$0xff pattern:$0x75316420]
  %v201 = vld.sshfl [vmem:[#allocation1 + $0x18] sm:$0xff pattern:$0x75316420]
  %v202 = vld.sshfl [vmem:[#allocation1 + $0x20] sm:$0xff pattern:$0x75316420]
  %v203 = vld.sshfl [vmem:[#allocation1 + $0x28] sm:$0xff pattern:$0x75316420]
  %v204 = vld.sshfl [vmem:[#allocation1 + $0x30] sm:$0xff pattern:$0x75316420]
  %v205 = vld.sshfl [vmem:[#allocation1 + $0x38] sm:$0xff pattern:$0x75316420]
  %206 = vst [vmem:[#allocation1] ss:$2 sm:$0xff] %v21
  %207 = vst [vmem:[%s192] ss:$2 sm:$0xff] %v22
  %208 = vst [vmem:[%s194] ss:$2 sm:$0xff] %v23
  %209 = vst [vmem:[%s196] ss:$2 sm:$0xff] %v24
  %v210 = vld.sshfl [vmem:[#allocation1] sm:$0xff pattern:$0x75316420]
  %v211 = vld.sshfl [vmem:[#allocation1 + $0x8] sm:$0xff pattern:$0x75316420]
  %v212 = vld.sshfl [vmem:[#allocation1 + $0x10] sm:$0xff pattern:$0x75316420]
  %v213 = vld.sshfl [vmem:[#allocation1 + $0x18] sm:$0xff pattern:$0x75316420]
  %v214 = vld.sshfl [vmem:[#allocation1 + $0x20] sm:$0xff pattern:$0x75316420]
  %v215 = vld.sshfl [vmem:[#allocation1 + $0x28] sm:$0xff pattern:$0x75316420]
  %v216 = vld.sshfl [vmem:[#allocation1 + $0x30] sm:$0xff pattern:$0x75316420]
  %v217 = vld.sshfl [vmem:[#allocation1 + $0x38] sm:$0xff pattern:$0x75316420]
  %234 = vrot.lane.b32.xlu0 %v198, 16
  %v235 = vpop.permute.xlu0 %234
  %236 = vrot.lane.b32.xlu0 %v199, 16
  %v237 = vpop.permute.xlu0 %236
  %238 = vrot.lane.b32.xlu0 %v200, 16
  %v239 = vpop.permute.xlu0 %238
  %240 = vrot.lane.b32.xlu0 %v201, 16
  %v241 = vpop.permute.xlu0 %240
  %242 = vrot.lane.b32.xlu0 %v202, 16
  %v243 = vpop.permute.xlu0 %242
  %244 = vrot.lane.b32.xlu0 %v203, 16
  %v245 = vpop.permute.xlu0 %244
  %246 = vrot.lane.b32.xlu0 %v204, 16
  %v247 = vpop.permute.xlu0 %246
  %248 = vrot.lane.b32.xlu0 %v205, 16
  %v249 = vpop.permute.xlu0 %248
  %250 = vrot.lane.b32.xlu0 %v210, 16
  %v251 = vpop.permute.xlu0 %250
  %252 = vrot.lane.b32.xlu0 %v211, 16
  %v253 = vpop.permute.xlu0 %252
  %254 = vrot.lane.b32.xlu0 %v212, 16
  %v255 = vpop.permute.xlu0 %254
  %256 = vrot.lane.b32.xlu0 %v213, 16
  %v257 = vpop.permute.xlu0 %256
  %258 = vrot.lane.b32.xlu0 %v214, 16
  %v259 = vpop.permute.xlu0 %258
  %260 = vrot.lane.b32.xlu0 %v215, 16
  %v261 = vpop.permute.xlu0 %260
  %262 = vrot.lane.b32.xlu0 %v216, 16
  %v263 = vpop.permute.xlu0 %262
  %264 = vrot.lane.b32.xlu0 %v217, 16
  %v265 = vpop.permute.xlu0 %264
  %vm266 = vcmp.lt.s32.totalorder %v141, 16
  %v267 = vsel %vm266, %v263, %v265
  %v268 = vsel %vm266, %v261, %v263
  %v269 = vsel %vm266, %v259, %v261
  %v270 = vsel %vm266, %v257, %v259
  %v271 = vsel %vm266, %v255, %v257
  %v272 = vsel %vm266, %v253, %v255
  %v273 = vsel %vm266, %v251, %v253
  %v274 = vsel %vm266, %v249, %v251
  %v275 = vsel %vm266, %v247, %v249
  %v276 = vsel %vm266, %v245, %v247
  %v277 = vsel %vm266, %v243, %v245
  %v278 = vsel %vm266, %v241, %v243
  %v279 = vsel %vm266, %v239, %v241
  %v280 = vsel %vm266, %v237, %v239
  %v281 = vsel %vm266, %v235, %v237
  %v282 = vsel %vm266, %v265, %v235
  %v283 = vperm.slane %v25, 1
  %v284 = vperm.slane %v26, 1
  %v285 = vperm.slane %v27, 1
  %v286 = vperm.slane %v28, 1
  %v287 = vperm.slane %v29, 1
  %v288 = vperm.slane %v30, 1
  %v289 = vperm.slane %v31, 1
  %v290 = vperm.slane %v32, 1
  %v291 = vperm.slane %v33, 1
  %v292 = vperm.slane %v34, 1
  %v293 = vperm.slane %v35, 1
  %v294 = vperm.slane %v36, 1
  %v295 = vperm.slane %v37, 1
  %v296 = vperm.slane %v38, 1
  %v297 = vperm.slane %v39, 1
  %v298 = vperm.slane %v40, 1
  %v299 = vmul.f32 %v282, %v283
  %v300 = vmul.f32 %v281, %v284
  %v301 = vmul.f32 %v280, %v285
  %v302 = vmul.f32 %v279, %v286
  %v303 = vmul.f32 %v278, %v287
  %v304 = vmul.f32 %v277, %v288
  %v305 = vmul.f32 %v276, %v289
  %v306 = vmul.f32 %v275, %v290
  %v307 = vmul.f32 %v274, %v291
  %v308 = vmul.f32 %v273, %v292
  %v309 = vmul.f32 %v272, %v293
  %v310 = vmul.f32 %v271, %v294
  %v311 = vmul.f32 %v270, %v295
  %v312 = vmul.f32 %v269, %v296
  %v313 = vmul.f32 %v268, %v297
  %v314 = vmul.f32 %v267, %v298
  %315 = vst [vmem:[#allocation1] ss:$2 sm:$0xff] %v17
  %s316 = scalar_lea.vmem [#allocation1], 16
  %317 = vst [vmem:[%s316] ss:$2 sm:$0xff] %v18
  %s318 = scalar_lea.vmem [#allocation1], 32
  %319 = vst [vmem:[%s318] ss:$2 sm:$0xff] %v19
  %s320 = scalar_lea.vmem [#allocation1], 48
  %321 = vst [vmem:[%s320] ss:$2 sm:$0xff] %v20
  %v322 = vld.sshfl [vmem:[#allocation1] sm:$0xff pattern:$0x75316420]
  %v323 = vld.sshfl [vmem:[#allocation1 + $0x8] sm:$0xff pattern:$0x75316420]
  %v324 = vld.sshfl [vmem:[#allocation1 + $0x10] sm:$0xff pattern:$0x75316420]
  %v325 = vld.sshfl [vmem:[#allocation1 + $0x18] sm:$0xff pattern:$0x75316420]
  %v326 = vld.sshfl [vmem:[#allocation1 + $0x20] sm:$0xff pattern:$0x75316420]
  %v327 = vld.sshfl [vmem:[#allocation1 + $0x28] sm:$0xff pattern:$0x75316420]
  %v328 = vld.sshfl [vmem:[#allocation1 + $0x30] sm:$0xff pattern:$0x75316420]
  %v329 = vld.sshfl [vmem:[#allocation1 + $0x38] sm:$0xff pattern:$0x75316420]
  %330 = vst [vmem:[#allocation1] ss:$2 sm:$0xff] %v21
  %331 = vst [vmem:[%s316] ss:$2 sm:$0xff] %v22
  %332 = vst [vmem:[%s318] ss:$2 sm:$0xff] %v23
  %333 = vst [vmem:[%s320] ss:$2 sm:$0xff] %v24
  %v334 = vld.sshfl [vmem:[#allocation1] sm:$0xff pattern:$0x75316420]
  %v335 = vld.sshfl [vmem:[#allocation1 + $0x8] sm:$0xff pattern:$0x75316420]
  %v336 = vld.sshfl [vmem:[#allocation1 + $0x10] sm:$0xff pattern:$0x75316420]
  %v337 = vld.sshfl [vmem:[#allocation1 + $0x18] sm:$0xff pattern:$0x75316420]
  %v338 = vld.sshfl [vmem:[#allocation1 + $0x20] sm:$0xff pattern:$0x75316420]
  %v339 = vld.sshfl [vmem:[#allocation1 + $0x28] sm:$0xff pattern:$0x75316420]
  %v340 = vld.sshfl [vmem:[#allocation1 + $0x30] sm:$0xff pattern:$0x75316420]
  %v341 = vld.sshfl [vmem:[#allocation1 + $0x38] sm:$0xff pattern:$0x75316420]
  %358 = vrot.lane.b32.xlu0 %v322, 15
  %v359 = vpop.permute.xlu0 %358
  %360 = vrot.lane.b32.xlu0 %v323, 15
  %v361 = vpop.permute.xlu0 %360
  %362 = vrot.lane.b32.xlu0 %v324, 15
  %v363 = vpop.permute.xlu0 %362
  %364 = vrot.lane.b32.xlu0 %v325, 15
  %v365 = vpop.permute.xlu0 %364
  %366 = vrot.lane.b32.xlu0 %v326, 15
  %v367 = vpop.permute.xlu0 %366
  %368 = vrot.lane.b32.xlu0 %v327, 15
  %v369 = vpop.permute.xlu0 %368
  %370 = vrot.lane.b32.xlu0 %v328, 15
  %v371 = vpop.permute.xlu0 %370
  %372 = vrot.lane.b32.xlu0 %v329, 15
  %v373 = vpop.permute.xlu0 %372
  %374 = vrot.lane.b32.xlu0 %v334, 15
  %v375 = vpop.permute.xlu0 %374
  %376 = vrot.lane.b32.xlu0 %v335, 15
  %v377 = vpop.permute.xlu0 %376
  %378 = vrot.lane.b32.xlu0 %v336, 15
  %v379 = vpop.permute.xlu0 %378
  %380 = vrot.lane.b32.xlu0 %v337, 15
  %v381 = vpop.permute.xlu0 %380
  %382 = vrot.lane.b32.xlu0 %v338, 15
  %v383 = vpop.permute.xlu0 %382
  %384 = vrot.lane.b32.xlu0 %v339, 15
  %v385 = vpop.permute.xlu0 %384
  %386 = vrot.lane.b32.xlu0 %v340, 15
  %v387 = vpop.permute.xlu0 %386
  %388 = vrot.lane.b32.xlu0 %v341, 15
  %v389 = vpop.permute.xlu0 %388
  %vm390 = vcmp.lt.s32.totalorder %v141, 15
  %v391 = vsel %vm390, %v387, %v389
  %v392 = vsel %vm390, %v385, %v387
  %v393 = vsel %vm390, %v383, %v385
  %v394 = vsel %vm390, %v381, %v383
  %v395 = vsel %vm390, %v379, %v381
  %v396 = vsel %vm390, %v377, %v379
  %v397 = vsel %vm390, %v375, %v377
  %v398 = vsel %vm390, %v373, %v375
  %v399 = vsel %vm390, %v371, %v373
  %v400 = vsel %vm390, %v369, %v371
  %v401 = vsel %vm390, %v367, %v369
  %v402 = vsel %vm390, %v365, %v367
  %v403 = vsel %vm390, %v363, %v365
  %v404 = vsel %vm390, %v361, %v363
  %v405 = vsel %vm390, %v359, %v361
  %v406 = vsel %vm390, %v389, %v359
  %v407 = vperm.slane %v25, 2
  %v408 = vperm.slane %v26, 2
  %v409 = vperm.slane %v27, 2
  %v410 = vperm.slane %v28, 2
  %v411 = vperm.slane %v29, 2
  %v412 = vperm.slane %v30, 2
  %v413 = vperm.slane %v31, 2
  %v414 = vperm.slane %v32, 2
  %v415 = vperm.slane %v33, 2
  %v416 = vperm.slane %v34, 2
  %v417 = vperm.slane %v35, 2
  %v418 = vperm.slane %v36, 2
  %v419 = vperm.slane %v37, 2
  %v420 = vperm.slane %v38, 2
  %v421 = vperm.slane %v39, 2
  %v422 = vperm.slane %v40, 2
  %v423 = vmul.f32 %v406, %v407
  %v424 = vmul.f32 %v405, %v408
  %v425 = vmul.f32 %v404, %v409
  %v426 = vmul.f32 %v403, %v410
  %v427 = vmul.f32 %v402, %v411
  %v428 = vmul.f32 %v401, %v412
  %v429 = vmul.f32 %v400, %v413
  %v430 = vmul.f32 %v399, %v414
  %v431 = vmul.f32 %v398, %v415
  %v432 = vmul.f32 %v397, %v416
  %v433 = vmul.f32 %v396, %v417
  %v434 = vmul.f32 %v395, %v418
  %v435 = vmul.f32 %v394, %v419
  %v436 = vmul.f32 %v393, %v420
  %v437 = vmul.f32 %v392, %v421
  %v438 = vmul.f32 %v391, %v422
  %439 = vst [vmem:[#allocation1] ss:$2 sm:$0xff] %v17
  %s440 = scalar_lea.vmem [#allocation1], 16
  %441 = vst [vmem:[%s440] ss:$2 sm:$0xff] %v18
  %s442 = scalar_lea.vmem [#allocation1], 32
  %443 = vst [vmem:[%s442] ss:$2 sm:$0xff] %v19
  %s444 = scalar_lea.vmem [#allocation1], 48
  %445 = vst [vmem:[%s444] ss:$2 sm:$0xff] %v20
  %v446 = vld.sshfl [vmem:[#allocation1] sm:$0xff pattern:$0x75316420]
  %v447 = vld.sshfl [vmem:[#allocation1 + $0x8] sm:$0xff pattern:$0x75316420]
  %v448 = vld.sshfl [vmem:[#allocation1 + $0x10] sm:$0xff pattern:$0x75316420]
  %v449 = vld.sshfl [vmem:[#allocation1 + $0x18] sm:$0xff pattern:$0x75316420]
  %v450 = vld.sshfl [vmem:[#allocation1 + $0x20] sm:$0xff pattern:$0x75316420]
  %v451 = vld.sshfl [vmem:[#allocation1 + $0x28] sm:$0xff pattern:$0x75316420]
  %v452 = vld.sshfl [vmem:[#allocation1 + $0x30] sm:$0xff pattern:$0x75316420]
  %v453 = vld.sshfl [vmem:[#allocation1 + $0x38] sm:$0xff pattern:$0x75316420]
  %454 = vst [vmem:[#allocation1] ss:$2 sm:$0xff] %v21
  %455 = vst [vmem:[%s440] ss:$2 sm:$0xff] %v22
  %456 = vst [vmem:[%s442] ss:$2 sm:$0xff] %v23
  %457 = vst [vmem:[%s444] ss:$2 sm:$0xff] %v24
  %v458 = vld.sshfl [vmem:[#allocation1] sm:$0xff pattern:$0x75316420]
  %v459 = vld.sshfl [vmem:[#allocation1 + $0x8] sm:$0xff pattern:$0x75316420]
  %v460 = vld.sshfl [vmem:[#allocation1 + $0x10] sm:$0xff pattern:$0x75316420]
  %v461 = vld.sshfl [vmem:[#allocation1 + $0x18] sm:$0xff pattern:$0x75316420]
  %v462 = vld.sshfl [vmem:[#allocation1 + $0x20] sm:$0xff pattern:$0x75316420]
  %v463 = vld.sshfl [vmem:[#allocation1 + $0x28] sm:$0xff pattern:$0x75316420]
  %v464 = vld.sshfl [vmem:[#allocation1 + $0x30] sm:$0xff pattern:$0x75316420]
  %v465 = vld.sshfl [vmem:[#allocation1 + $0x38] sm:$0xff pattern:$0x75316420]
  %482 = vrot.lane.b32.xlu0 %v446, 1
  %v483 = vpop.permute.xlu0 %482
  %484 = vrot.lane.b32.xlu0 %v447, 1
  %v485 = vpop.permute.xlu0 %484
  %486 = vrot.lane.b32.xlu0 %v448, 1
  %v487 = vpop.permute.xlu0 %486
  %488 = vrot.lane.b32.xlu0 %v449, 1
  %v489 = vpop.permute.xlu0 %488
  %490 = vrot.lane.b32.xlu0 %v450, 1
  %v491 = vpop.permute.xlu0 %490
  %492 = vrot.lane.b32.xlu0 %v451, 1
  %v493 = vpop.permute.xlu0 %492
  %494 = vrot.lane.b32.xlu0 %v452, 1
  %v495 = vpop.permute.xlu0 %494
  %496 = vrot.lane.b32.xlu0 %v453, 1
  %v497 = vpop.permute.xlu0 %496
  %498 = vrot.lane.b32.xlu0 %v458, 1
  %v499 = vpop.permute.xlu0 %498
  %500 = vrot.lane.b32.xlu0 %v459, 1
  %v501 = vpop.permute.xlu0 %500
  %502 = vrot.lane.b32.xlu0 %v460, 1
  %v503 = vpop.permute.xlu0 %502
  %504 = vrot.lane.b32.xlu0 %v461, 1
  %v505 = vpop.permute.xlu0 %504
  %506 = vrot.lane.b32.xlu0 %v462, 1
  %v507 = vpop.permute.xlu0 %506
  %508 = vrot.lane.b32.xlu0 %v463, 1
  %v509 = vpop.permute.xlu0 %508
  %510 = vrot.lane.b32.xlu0 %v464, 1
  %v511 = vpop.permute.xlu0 %510
  %512 = vrot.lane.b32.xlu0 %v465, 1
  %v513 = vpop.permute.xlu0 %512
  %vm514 = vcmp.lt.s32.totalorder %v141, 1
  %v515 = vsel %vm514, %v511, %v513
  %v516 = vsel %vm514, %v509, %v511
  %v517 = vsel %vm514, %v507, %v509
  %v518 = vsel %vm514, %v505, %v507
  %v519 = vsel %vm514, %v503, %v505
  %v520 = vsel %vm514, %v501, %v503
  %v521 = vsel %vm514, %v499, %v501
  %v522 = vsel %vm514, %v497, %v499
  %v523 = vsel %vm514, %v495, %v497
  %v524 = vsel %vm514, %v493, %v495
  %v525 = vsel %vm514, %v491, %v493
  %v526 = vsel %vm514, %v489, %v491
  %v527 = vsel %vm514, %v487, %v489
  %v528 = vsel %vm514, %v485, %v487
  %v529 = vsel %vm514, %v483, %v485
  %v530 = vsel %vm514, %v513, %v483
  %v531 = vperm.slane %v25, 3
  %v532 = vperm.slane %v26, 3
  %v533 = vperm.slane %v27, 3
  %v534 = vperm.slane %v28, 3
  %v535 = vperm.slane %v29, 3
  %v536 = vperm.slane %v30, 3
  %v537 = vperm.slane %v31, 3
  %v538 = vperm.slane %v32, 3
  %v539 = vperm.slane %v33, 3
  %v540 = vperm.slane %v34, 3
  %v541 = vperm.slane %v35, 3
  %v542 = vperm.slane %v36, 3
  %v543 = vperm.slane %v37, 3
  %v544 = vperm.slane %v38, 3
  %v545 = vperm.slane %v39, 3
  %v546 = vperm.slane %v40, 3
  %v547 = vmul.f32 %v530, %v531
  %v548 = vmul.f32 %v529, %v532
  %v549 = vmul.f32 %v528, %v533
  %v550 = vmul.f32 %v527, %v534
  %v551 = vmul.f32 %v526, %v535
  %v552 = vmul.f32 %v525, %v536
  %v553 = vmul.f32 %v524, %v537
  %v554 = vmul.f32 %v523, %v538
  %v555 = vmul.f32 %v522, %v539
  %v556 = vmul.f32 %v521, %v540
  %v557 = vmul.f32 %v520, %v541
  %v558 = vmul.f32 %v519, %v542
  %v559 = vmul.f32 %v518, %v543
  %v560 = vmul.f32 %v517, %v544
  %v561 = vmul.f32 %v516, %v545
  %v562 = vmul.f32 %v515, %v546
  %563 = vst [vmem:[#allocation1] ss:$2 sm:$0xff] %v17
  %s564 = scalar_lea.vmem [#allocation1], 16
  %565 = vst [vmem:[%s564] ss:$2 sm:$0xff] %v18
  %s566 = scalar_lea.vmem [#allocation1], 32
  %567 = vst [vmem:[%s566] ss:$2 sm:$0xff] %v19
  %s568 = scalar_lea.vmem [#allocation1], 48
  %569 = vst [vmem:[%s568] ss:$2 sm:$0xff] %v20
  %v570 = vld.sshfl [vmem:[#allocation1] sm:$0xff pattern:$0x75316420]
  %v571 = vld.sshfl [vmem:[#allocation1 + $0x8] sm:$0xff pattern:$0x75316420]
  %v572 = vld.sshfl [vmem:[#allocation1 + $0x10] sm:$0xff pattern:$0x75316420]
  %v573 = vld.sshfl [vmem:[#allocation1 + $0x18] sm:$0xff pattern:$0x75316420]
  %v574 = vld.sshfl [vmem:[#allocation1 + $0x20] sm:$0xff pattern:$0x75316420]
  %v575 = vld.sshfl [vmem:[#allocation1 + $0x28] sm:$0xff pattern:$0x75316420]
  %v576 = vld.sshfl [vmem:[#allocation1 + $0x30] sm:$0xff pattern:$0x75316420]
  %v577 = vld.sshfl [vmem:[#allocation1 + $0x38] sm:$0xff pattern:$0x75316420]
  %578 = vst [vmem:[#allocation1] ss:$2 sm:$0xff] %v21
  %579 = vst [vmem:[%s564] ss:$2 sm:$0xff] %v22
  %580 = vst [vmem:[%s566] ss:$2 sm:$0xff] %v23
  %581 = vst [vmem:[%s568] ss:$2 sm:$0xff] %v24
  %v582 = vld.sshfl [vmem:[#allocation1] sm:$0xff pattern:$0x75316420]
  %v583 = vld.sshfl [vmem:[#allocation1 + $0x8] sm:$0xff pattern:$0x75316420]
  %v584 = vld.sshfl [vmem:[#allocation1 + $0x10] sm:$0xff pattern:$0x75316420]
  %v585 = vld.sshfl [vmem:[#allocation1 + $0x18] sm:$0xff pattern:$0x75316420]
  %v586 = vld.sshfl [vmem:[#allocation1 + $0x20] sm:$0xff pattern:$0x75316420]
  %v587 = vld.sshfl [vmem:[#allocation1 + $0x28] sm:$0xff pattern:$0x75316420]
  %v588 = vld.sshfl [vmem:[#allocation1 + $0x30] sm:$0xff pattern:$0x75316420]
  %v589 = vld.sshfl [vmem:[#allocation1 + $0x38] sm:$0xff pattern:$0x75316420]
  %606 = vrot.lane.b32.xlu0 %v570, 127
  %v607 = vpop.permute.xlu0 %606
  %608 = vrot.lane.b32.xlu0 %v571, 127
  %v609 = vpop.permute.xlu0 %608
  %610 = vrot.lane.b32.xlu0 %v572, 127
  %v611 = vpop.permute.xlu0 %610
  %612 = vrot.lane.b32.xlu0 %v573, 127
  %v613 = vpop.permute.xlu0 %612
  %614 = vrot.lane.b32.xlu0 %v574, 127
  %v615 = vpop.permute.xlu0 %614
  %616 = vrot.lane.b32.xlu0 %v575, 127
  %v617 = vpop.permute.xlu0 %616
  %618 = vrot.lane.b32.xlu0 %v576, 127
  %v619 = vpop.permute.xlu0 %618
  %620 = vrot.lane.b32.xlu0 %v577, 127
  %v621 = vpop.permute.xlu0 %620
  %622 = vrot.lane.b32.xlu0 %v582, 127
  %v623 = vpop.permute.xlu0 %622
  %624 = vrot.lane.b32.xlu0 %v583, 127
  %v625 = vpop.permute.xlu0 %624
  %626 = vrot.lane.b32.xlu0 %v584, 127
  %v627 = vpop.permute.xlu0 %626
  %628 = vrot.lane.b32.xlu0 %v585, 127
  %v629 = vpop.permute.xlu0 %628
  %630 = vrot.lane.b32.xlu0 %v586, 127
  %v631 = vpop.permute.xlu0 %630
  %632 = vrot.lane.b32.xlu0 %v587, 127
  %v633 = vpop.permute.xlu0 %632
  %634 = vrot.lane.b32.xlu0 %v588, 127
  %v635 = vpop.permute.xlu0 %634
  %636 = vrot.lane.b32.xlu0 %v589, 127
  %v637 = vpop.permute.xlu0 %636
  %vm638 = vcmp.lt.s32.totalorder %v141, 127
  %v639 = vsel %vm638, %v635, %v637
  %v640 = vsel %vm638, %v633, %v635
  %v641 = vsel %vm638, %v631, %v633
  %v642 = vsel %vm638, %v629, %v631
  %v643 = vsel %vm638, %v627, %v629
  %v644 = vsel %vm638, %v625, %v627
  %v645 = vsel %vm638, %v623, %v625
  %v646 = vsel %vm638, %v621, %v623
  %v647 = vsel %vm638, %v619, %v621
  %v648 = vsel %vm638, %v617, %v619
  %v649 = vsel %vm638, %v615, %v617
  %v650 = vsel %vm638, %v613, %v615
  %v651 = vsel %vm638, %v611, %v613
  %v652 = vsel %vm638, %v609, %v611
  %v653 = vsel %vm638, %v607, %v609
  %v654 = vsel %vm638, %v637, %v607
  %v655 = vperm.slane %v25, 5
  %v656 = vperm.slane %v26, 5
  %v657 = vperm.slane %v27, 5
  %v658 = vperm.slane %v28, 5
  %v659 = vperm.slane %v29, 5
  %v660 = vperm.slane %v30, 5
  %v661 = vperm.slane %v31, 5
  %v662 = vperm.slane %v32, 5
  %v663 = vperm.slane %v33, 5
  %v664 = vperm.slane %v34, 5
  %v665 = vperm.slane %v35, 5
  %v666 = vperm.slane %v36, 5
  %v667 = vperm.slane %v37, 5
  %v668 = vperm.slane %v38, 5
  %v669 = vperm.slane %v39, 5
  %v670 = vperm.slane %v40, 5
  %v671 = vmul.f32 %v653, %v655
  %v672 = vmul.f32 %v652, %v656
  %v673 = vmul.f32 %v651, %v657
  %v674 = vmul.f32 %v650, %v658
  %v675 = vmul.f32 %v649, %v659
  %v676 = vmul.f32 %v648, %v660
  %v677 = vmul.f32 %v647, %v661
  %v678 = vmul.f32 %v646, %v662
  %v679 = vmul.f32 %v645, %v663
  %v680 = vmul.f32 %v644, %v664
  %v681 = vmul.f32 %v643, %v665
  %v682 = vmul.f32 %v642, %v666
  %v683 = vmul.f32 %v641, %v667
  %v684 = vmul.f32 %v640, %v668
  %v685 = vmul.f32 %v639, %v669
  %v686 = vmul.f32 %v654, %v670
  %687 = vst [vmem:[#allocation1] ss:$2 sm:$0xff] %v17
  %s688 = scalar_lea.vmem [#allocation1], 16
  %689 = vst [vmem:[%s688] ss:$2 sm:$0xff] %v18
  %s690 = scalar_lea.vmem [#allocation1], 32
  %691 = vst [vmem:[%s690] ss:$2 sm:$0xff] %v19
  %s692 = scalar_lea.vmem [#allocation1], 48
  %693 = vst [vmem:[%s692] ss:$2 sm:$0xff] %v20
  %v694 = vld.sshfl [vmem:[#allocation1] sm:$0xff pattern:$0x75316420]
  %v695 = vld.sshfl [vmem:[#allocation1 + $0x8] sm:$0xff pattern:$0x75316420]
  %v696 = vld.sshfl [vmem:[#allocation1 + $0x10] sm:$0xff pattern:$0x75316420]
  %v697 = vld.sshfl [vmem:[#allocation1 + $0x18] sm:$0xff pattern:$0x75316420]
  %v698 = vld.sshfl [vmem:[#allocation1 + $0x20] sm:$0xff pattern:$0x75316420]
  %v699 = vld.sshfl [vmem:[#allocation1 + $0x28] sm:$0xff pattern:$0x75316420]
  %v700 = vld.sshfl [vmem:[#allocation1 + $0x30] sm:$0xff pattern:$0x75316420]
  %v701 = vld.sshfl [vmem:[#allocation1 + $0x38] sm:$0xff pattern:$0x75316420]
  %702 = vst [vmem:[#allocation1] ss:$2 sm:$0xff] %v21
  %703 = vst [vmem:[%s688] ss:$2 sm:$0xff] %v22
  %704 = vst [vmem:[%s690] ss:$2 sm:$0xff] %v23
  %705 = vst [vmem:[%s692] ss:$2 sm:$0xff] %v24
  %v706 = vld.sshfl [vmem:[#allocation1] sm:$0xff pattern:$0x75316420]
  %v707 = vld.sshfl [vmem:[#allocation1 + $0x8] sm:$0xff pattern:$0x75316420]
  %v708 = vld.sshfl [vmem:[#allocation1 + $0x10] sm:$0xff pattern:$0x75316420]
  %v709 = vld.sshfl [vmem:[#allocation1 + $0x18] sm:$0xff pattern:$0x75316420]
  %v710 = vld.sshfl [vmem:[#allocation1 + $0x20] sm:$0xff pattern:$0x75316420]
  %v711 = vld.sshfl [vmem:[#allocation1 + $0x28] sm:$0xff pattern:$0x75316420]
  %v712 = vld.sshfl [vmem:[#allocation1 + $0x30] sm:$0xff pattern:$0x75316420]
  %v713 = vld.sshfl [vmem:[#allocation1 + $0x38] sm:$0xff pattern:$0x75316420]
  %730 = vrot.lane.b32.xlu0 %v694, 113
  %v731 = vpop.permute.xlu0 %730
  %732 = vrot.lane.b32.xlu0 %v695, 113
  %v733 = vpop.permute.xlu0 %732
  %734 = vrot.lane.b32.xlu0 %v696, 113
  %v735 = vpop.permute.xlu0 %734
  %736 = vrot.lane.b32.xlu0 %v697, 113
  %v737 = vpop.permute.xlu0 %736
  %738 = vrot.lane.b32.xlu0 %v698, 113
  %v739 = vpop.permute.xlu0 %738
  %740 = vrot.lane.b32.xlu0 %v699, 113
  %v741 = vpop.permute.xlu0 %740
  %742 = vrot.lane.b32.xlu0 %v700, 113
  %v743 = vpop.permute.xlu0 %742
  %744 = vrot.lane.b32.xlu0 %v701, 113
  %v745 = vpop.permute.xlu0 %744
  %746 = vrot.lane.b32.xlu0 %v706, 113
  %v747 = vpop.permute.xlu0 %746
  %748 = vrot.lane.b32.xlu0 %v707, 113
  %v749 = vpop.permute.xlu0 %748
  %750 = vrot.lane.b32.xlu0 %v708, 113
  %v751 = vpop.permute.xlu0 %750
  %752 = vrot.lane.b32.xlu0 %v709, 113
  %v753 = vpop.permute.xlu0 %752
  %754 = vrot.lane.b32.xlu0 %v710, 113
  %v755 = vpop.permute.xlu0 %754
  %756 = vrot.lane.b32.xlu0 %v711, 113
  %v757 = vpop.permute.xlu0 %756
  %758 = vrot.lane.b32.xlu0 %v712, 113
  %v759 = vpop.permute.xlu0 %758
  %760 = vrot.lane.b32.xlu0 %v713, 113
  %v761 = vpop.permute.xlu0 %760
  %vm762 = vcmp.lt.s32.totalorder %v141, 113
  %v763 = vsel %vm762, %v759, %v761
  %v764 = vsel %vm762, %v757, %v759
  %v765 = vsel %vm762, %v755, %v757
  %v766 = vsel %vm762, %v753, %v755
  %v767 = vsel %vm762, %v751, %v753
  %v768 = vsel %vm762, %v749, %v751
  %v769 = vsel %vm762, %v747, %v749
  %v770 = vsel %vm762, %v745, %v747
  %v771 = vsel %vm762, %v743, %v745
  %v772 = vsel %vm762, %v741, %v743
  %v773 = vsel %vm762, %v739, %v741
  %v774 = vsel %vm762, %v737, %v739
  %v775 = vsel %vm762, %v735, %v737
  %v776 = vsel %vm762, %v733, %v735
  %v777 = vsel %vm762, %v731, %v733
  %v778 = vsel %vm762, %v761, %v731
  %v779 = vperm.slane %v25, 6
  %v780 = vperm.slane %v26, 6
  %v781 = vperm.slane %v27, 6
  %v782 = vperm.slane %v28, 6
  %v783 = vperm.slane %v29, 6
  %v784 = vperm.slane %v30, 6
  %v785 = vperm.slane %v31, 6
  %v786 = vperm.slane %v32, 6
  %v787 = vperm.slane %v33, 6
  %v788 = vperm.slane %v34, 6
  %v789 = vperm.slane %v35, 6
  %v790 = vperm.slane %v36, 6
  %v791 = vperm.slane %v37, 6
  %v792 = vperm.slane %v38, 6
  %v793 = vperm.slane %v39, 6
  %v794 = vperm.slane %v40, 6
  %v795 = vmul.f32 %v777, %v779
  %v796 = vmul.f32 %v776, %v780
  %v797 = vmul.f32 %v775, %v781
  %v798 = vmul.f32 %v774, %v782
  %v799 = vmul.f32 %v773, %v783
  %v800 = vmul.f32 %v772, %v784
  %v801 = vmul.f32 %v771, %v785
  %v802 = vmul.f32 %v770, %v786
  %v803 = vmul.f32 %v769, %v787
  %v804 = vmul.f32 %v768, %v788
  %v805 = vmul.f32 %v767, %v789
  %v806 = vmul.f32 %v766, %v790
  %v807 = vmul.f32 %v765, %v791
  %v808 = vmul.f32 %v764, %v792
  %v809 = vmul.f32 %v763, %v793
  %v810 = vmul.f32 %v778, %v794
  %811 = vst [vmem:[#allocation1] ss:$2 sm:$0xff] %v17
  %s812 = scalar_lea.vmem [#allocation1], 16
  %813 = vst [vmem:[%s812] ss:$2 sm:$0xff] %v18
  %s814 = scalar_lea.vmem [#allocation1], 32
  %815 = vst [vmem:[%s814] ss:$2 sm:$0xff] %v19
  %s816 = scalar_lea.vmem [#allocation1], 48
  %817 = vst [vmem:[%s816] ss:$2 sm:$0xff] %v20
  %v818 = vld.sshfl [vmem:[#allocation1] sm:$0xff pattern:$0x75316420]
  %v819 = vld.sshfl [vmem:[#allocation1 + $0x8] sm:$0xff pattern:$0x75316420]
  %v820 = vld.sshfl [vmem:[#allocation1 + $0x10] sm:$0xff pattern:$0x75316420]
  %v821 = vld.sshfl [vmem:[#allocation1 + $0x18] sm:$0xff pattern:$0x75316420]
  %v822 = vld.sshfl [vmem:[#allocation1 + $0x20] sm:$0xff pattern:$0x75316420]
  %v823 = vld.sshfl [vmem:[#allocation1 + $0x28] sm:$0xff pattern:$0x75316420]
  %v824 = vld.sshfl [vmem:[#allocation1 + $0x30] sm:$0xff pattern:$0x75316420]
  %v825 = vld.sshfl [vmem:[#allocation1 + $0x38] sm:$0xff pattern:$0x75316420]
  %826 = vst [vmem:[#allocation1] ss:$2 sm:$0xff] %v21
  %827 = vst [vmem:[%s812] ss:$2 sm:$0xff] %v22
  %828 = vst [vmem:[%s814] ss:$2 sm:$0xff] %v23
  %829 = vst [vmem:[%s816] ss:$2 sm:$0xff] %v24
  %v830 = vld.sshfl [vmem:[#allocation1] sm:$0xff pattern:$0x75316420]
  %v831 = vld.sshfl [vmem:[#allocation1 + $0x8] sm:$0xff pattern:$0x75316420]
  %v832 = vld.sshfl [vmem:[#allocation1 + $0x10] sm:$0xff pattern:$0x75316420]
  %v833 = vld.sshfl [vmem:[#allocation1 + $0x18] sm:$0xff pattern:$0x75316420]
  %v834 = vld.sshfl [vmem:[#allocation1 + $0x20] sm:$0xff pattern:$0x75316420]
  %v835 = vld.sshfl [vmem:[#allocation1 + $0x28] sm:$0xff pattern:$0x75316420]
  %v836 = vld.sshfl [vmem:[#allocation1 + $0x30] sm:$0xff pattern:$0x75316420]
  %v837 = vld.sshfl [vmem:[#allocation1 + $0x38] sm:$0xff pattern:$0x75316420]
  %854 = vrot.lane.b32.xlu0 %v818, 112
  %v855 = vpop.permute.xlu0 %854
  %856 = vrot.lane.b32.xlu0 %v819, 112
  %v857 = vpop.permute.xlu0 %856
  %858 = vrot.lane.b32.xlu0 %v820, 112
  %v859 = vpop.permute.xlu0 %858
  %860 = vrot.lane.b32.xlu0 %v821, 112
  %v861 = vpop.permute.xlu0 %860
  %862 = vrot.lane.b32.xlu0 %v822, 112
  %v863 = vpop.permute.xlu0 %862
  %864 = vrot.lane.b32.xlu0 %v823, 112
  %v865 = vpop.permute.xlu0 %864
  %866 = vrot.lane.b32.xlu0 %v824, 112
  %v867 = vpop.permute.xlu0 %866
  %868 = vrot.lane.b32.xlu0 %v825, 112
  %v869 = vpop.permute.xlu0 %868
  %870 = vrot.lane.b32.xlu0 %v830, 112
  %v871 = vpop.permute.xlu0 %870
  %872 = vrot.lane.b32.xlu0 %v831, 112
  %v873 = vpop.permute.xlu0 %872
  %874 = vrot.lane.b32.xlu0 %v832, 112
  %v875 = vpop.permute.xlu0 %874
  %876 = vrot.lane.b32.xlu0 %v833, 112
  %v877 = vpop.permute.xlu0 %876
  %878 = vrot.lane.b32.xlu0 %v834, 112
  %v879 = vpop.permute.xlu0 %878
  %880 = vrot.lane.b32.xlu0 %v835, 112
  %v881 = vpop.permute.xlu0 %880
  %882 = vrot.lane.b32.xlu0 %v836, 112
  %v883 = vpop.permute.xlu0 %882
  %884 = vrot.lane.b32.xlu0 %v837, 112
  %v885 = vpop.permute.xlu0 %884
  %vm886 = vcmp.lt.s32.totalorder %v141, 112
  %v887 = vsel %vm886, %v883, %v885
  %v888 = vsel %vm886, %v881, %v883
  %v889 = vsel %vm886, %v879, %v881
  %v890 = vsel %vm886, %v877, %v879
  %v891 = vsel %vm886, %v875, %v877
  %v892 = vsel %vm886, %v873, %v875
  %v893 = vsel %vm886, %v871, %v873
  %v894 = vsel %vm886, %v869, %v871
  %v895 = vsel %vm886, %v867, %v869
  %v896 = vsel %vm886, %v865, %v867
  %v897 = vsel %vm886, %v863, %v865
  %v898 = vsel %vm886, %v861, %v863
  %v899 = vsel %vm886, %v859, %v861
  %v900 = vsel %vm886, %v857, %v859
  %v901 = vsel %vm886, %v855, %v857
  %v902 = vsel %vm886, %v885, %v855
  %v903 = vperm.slane %v25, 7
  %v904 = vperm.slane %v26, 7
  %v905 = vperm.slane %v27, 7
  %v906 = vperm.slane %v28, 7
  %v907 = vperm.slane %v29, 7
  %v908 = vperm.slane %v30, 7
  %v909 = vperm.slane %v31, 7
  %v910 = vperm.slane %v32, 7
  %v911 = vperm.slane %v33, 7
  %v912 = vperm.slane %v34, 7
  %v913 = vperm.slane %v35, 7
  %v914 = vperm.slane %v36, 7
  %v915 = vperm.slane %v37, 7
  %v916 = vperm.slane %v38, 7
  %v917 = vperm.slane %v39, 7
  %v918 = vperm.slane %v40, 7
  %v919 = vmul.f32 %v901, %v903
  %v920 = vmul.f32 %v900, %v904
  %v921 = vmul.f32 %v899, %v905
  %v922 = vmul.f32 %v898, %v906
  %v923 = vmul.f32 %v897, %v907
  %v924 = vmul.f32 %v896, %v908
  %v925 = vmul.f32 %v895, %v909
  %v926 = vmul.f32 %v894, %v910
  %v927 = vmul.f32 %v893, %v911
  %v928 = vmul.f32 %v892, %v912
  %v929 = vmul.f32 %v891, %v913
  %v930 = vmul.f32 %v890, %v914
  %v931 = vmul.f32 %v889, %v915
  %v932 = vmul.f32 %v888, %v916
  %v933 = vmul.f32 %v887, %v917
  %v934 = vmul.f32 %v902, %v918
  %935 = vst [vmem:[#allocation1] ss:$2 sm:$0xff] %v17
  %s936 = scalar_lea.vmem [#allocation1], 16
  %937 = vst [vmem:[%s936] ss:$2 sm:$0xff] %v18
  %s938 = scalar_lea.vmem [#allocation1], 32
  %939 = vst [vmem:[%s938] ss:$2 sm:$0xff] %v19
  %s940 = scalar_lea.vmem [#allocation1], 48
  %941 = vst [vmem:[%s940] ss:$2 sm:$0xff] %v20
  %v942 = vld.sshfl [vmem:[#allocation1] sm:$0xff pattern:$0x75316420]
  %v943 = vld.sshfl [vmem:[#allocation1 + $0x8] sm:$0xff pattern:$0x75316420]
  %v944 = vld.sshfl [vmem:[#allocation1 + $0x10] sm:$0xff pattern:$0x75316420]
  %v945 = vld.sshfl [vmem:[#allocation1 + $0x18] sm:$0xff pattern:$0x75316420]
  %v946 = vld.sshfl [vmem:[#allocation1 + $0x20] sm:$0xff pattern:$0x75316420]
  %v947 = vld.sshfl [vmem:[#allocation1 + $0x28] sm:$0xff pattern:$0x75316420]
  %v948 = vld.sshfl [vmem:[#allocation1 + $0x30] sm:$0xff pattern:$0x75316420]
  %v949 = vld.sshfl [vmem:[#allocation1 + $0x38] sm:$0xff pattern:$0x75316420]
  %950 = vst [vmem:[#allocation1] ss:$2 sm:$0xff] %v21
  %951 = vst [vmem:[%s936] ss:$2 sm:$0xff] %v22
  %952 = vst [vmem:[%s938] ss:$2 sm:$0xff] %v23
  %953 = vst [vmem:[%s940] ss:$2 sm:$0xff] %v24
  %v954 = vld.sshfl [vmem:[#allocation1] sm:$0xff pattern:$0x75316420]
  %v955 = vld.sshfl [vmem:[#allocation1 + $0x8] sm:$0xff pattern:$0x75316420]
  %v956 = vld.sshfl [vmem:[#allocation1 + $0x10] sm:$0xff pattern:$0x75316420]
  %v957 = vld.sshfl [vmem:[#allocation1 + $0x18] sm:$0xff pattern:$0x75316420]
  %v958 = vld.sshfl [vmem:[#allocation1 + $0x20] sm:$0xff pattern:$0x75316420]
  %v959 = vld.sshfl [vmem:[#allocation1 + $0x28] sm:$0xff pattern:$0x75316420]
  %v960 = vld.sshfl [vmem:[#allocation1 + $0x30] sm:$0xff pattern:$0x75316420]
  %v961 = vld.sshfl [vmem:[#allocation1 + $0x38] sm:$0xff pattern:$0x75316420]
  %978 = vrot.lane.b32.xlu0 %v942, 111
  %v979 = vpop.permute.xlu0 %978
  %980 = vrot.lane.b32.xlu0 %v943, 111
  %v981 = vpop.permute.xlu0 %980
  %982 = vrot.lane.b32.xlu0 %v944, 111
  %v983 = vpop.permute.xlu0 %982
  %984 = vrot.lane.b32.xlu0 %v945, 111
  %v985 = vpop.permute.xlu0 %984
  %986 = vrot.lane.b32.xlu0 %v946, 111
  %v987 = vpop.permute.xlu0 %986
  %988 = vrot.lane.b32.xlu0 %v947, 111
  %v989 = vpop.permute.xlu0 %988
  %990 = vrot.lane.b32.xlu0 %v948, 111
  %v991 = vpop.permute.xlu0 %990
  %992 = vrot.lane.b32.xlu0 %v949, 111
  %v993 = vpop.permute.xlu0 %992
  %994 = vrot.lane.b32.xlu0 %v954, 111
  %v995 = vpop.permute.xlu0 %994
  %996 = vrot.lane.b32.xlu0 %v955, 111
  %v997 = vpop.permute.xlu0 %996
  %998 = vrot.lane.b32.xlu0 %v956, 111
  %v999 = vpop.permute.xlu0 %998
  %1000 = vrot.lane.b32.xlu0 %v957, 111
  %v1001 = vpop.permute.xlu0 %1000
  %1002 = vrot.lane.b32.xlu0 %v958, 111
  %v1003 = vpop.permute.xlu0 %1002
  %1004 = vrot.lane.b32.xlu0 %v959, 111
  %v1005 = vpop.permute.xlu0 %1004
  %1006 = vrot.lane.b32.xlu0 %v960, 111
  %v1007 = vpop.permute.xlu0 %1006
  %1008 = vrot.lane.b32.xlu0 %v961, 111
  %v1009 = vpop.permute.xlu0 %1008
  %vm1010 = vcmp.lt.s32.totalorder %v141, 111
  %v1011 = vsel %vm1010, %v1007, %v1009
  %v1012 = vsel %vm1010, %v1005, %v1007
  %v1013 = vsel %vm1010, %v1003, %v1005
  %v1014 = vsel %vm1010, %v1001, %v1003
  %v1015 = vsel %vm1010, %v999, %v1001
  %v1016 = vsel %vm1010, %v997, %v999
  %v1017 = vsel %vm1010, %v995, %v997
  %v1018 = vsel %vm1010, %v993, %v995
  %v1019 = vsel %vm1010, %v991, %v993
  %v1020 = vsel %vm1010, %v989, %v991
  %v1021 = vsel %vm1010, %v987, %v989
  %v1022 = vsel %vm1010, %v985, %v987
  %v1023 = vsel %vm1010, %v983, %v985
  %v1024 = vsel %vm1010, %v981, %v983
  %v1025 = vsel %vm1010, %v979, %v981
  %v1026 = vsel %vm1010, %v1009, %v979
  %v1027 = vperm.slane %v41, 0
  %v1028 = vperm.slane %v42, 0
  %v1029 = vperm.slane %v43, 0
  %v1030 = vperm.slane %v44, 0
  %v1031 = vperm.slane %v45, 0
  %v1032 = vperm.slane %v46, 0
  %v1033 = vperm.slane %v47, 0
  %v1034 = vperm.slane %v48, 0
  %v1035 = vperm.slane %v49, 0
  %v1036 = vperm.slane %v50, 0
  %v1037 = vperm.slane %v51, 0
  %v1038 = vperm.slane %v52, 0
  %v1039 = vperm.slane %v53, 0
  %v1040 = vperm.slane %v54, 0
  %v1041 = vperm.slane %v55, 0
  %v1042 = vperm.slane %v56, 0
  %v1043 = vmul.f32 %v1025, %v1027
  %v1044 = vmul.f32 %v1024, %v1028
  %v1045 = vmul.f32 %v1023, %v1029
  %v1046 = vmul.f32 %v1022, %v1030
  %v1047 = vmul.f32 %v1021, %v1031
  %v1048 = vmul.f32 %v1020, %v1032
  %v1049 = vmul.f32 %v1019, %v1033
  %v1050 = vmul.f32 %v1018, %v1034
  %v1051 = vmul.f32 %v1017, %v1035
  %v1052 = vmul.f32 %v1016, %v1036
  %v1053 = vmul.f32 %v1015, %v1037
  %v1054 = vmul.f32 %v1014, %v1038
  %v1055 = vmul.f32 %v1013, %v1039
  %v1056 = vmul.f32 %v1012, %v1040
  %v1057 = vmul.f32 %v1011, %v1041
  %v1058 = vmul.f32 %v1026, %v1042
  %v1075 = vrot.slane %v299, 4
  %v1076 = vrot.slane %v300, 4
  %v1077 = vrot.slane %v301, 4
  %v1078 = vrot.slane %v302, 4
  %v1079 = vrot.slane %v303, 4
  %v1080 = vrot.slane %v304, 4
  %v1081 = vrot.slane %v305, 4
  %v1082 = vrot.slane %v306, 4
  %v1083 = vrot.slane %v307, 4
  %v1084 = vrot.slane %v308, 4
  %v1085 = vrot.slane %v309, 4
  %v1086 = vrot.slane %v310, 4
  %v1087 = vrot.slane %v311, 4
  %v1088 = vrot.slane %v312, 4
  %v1089 = vrot.slane %v313, 4
  %v1090 = vrot.slane %v314, 4
  %v1123 = vrot.slane %v547, 4
  %v1124 = vrot.slane %v548, 4
  %v1125 = vrot.slane %v549, 4
  %v1126 = vrot.slane %v550, 4
  %v1127 = vrot.slane %v551, 4
  %v1128 = vrot.slane %v552, 4
  %v1129 = vrot.slane %v553, 4
  %v1130 = vrot.slane %v554, 4
  %v1131 = vrot.slane %v555, 4
  %v1132 = vrot.slane %v556, 4
  %v1133 = vrot.slane %v557, 4
  %v1134 = vrot.slane %v558, 4
  %v1135 = vrot.slane %v559, 4
  %v1136 = vrot.slane %v560, 4
  %v1137 = vrot.slane %v561, 4
  %v1138 = vrot.slane %v562, 4
  %1155 = vst [vmem:[#allocation1] ss:$2 sm:$0xff] %v17
  %s1156 = scalar_lea.vmem [#allocation1], 16
  %1157 = vst [vmem:[%s1156] ss:$2 sm:$0xff] %v18
  %s1158 = scalar_lea.vmem [#allocation1], 32
  %1159 = vst [vmem:[%s1158] ss:$2 sm:$0xff] %v19
  %s1160 = scalar_lea.vmem [#allocation1], 48
  %1161 = vst [vmem:[%s1160] ss:$2 sm:$0xff] %v20
  %v1162 = vld.sshfl [vmem:[#allocation1] sm:$0xff pattern:$0x75316420]
  %v1163 = vld.sshfl [vmem:[#allocation1 + $0x8] sm:$0xff pattern:$0x75316420]
  %v1164 = vld.sshfl [vmem:[#allocation1 + $0x10] sm:$0xff pattern:$0x75316420]
  %v1165 = vld.sshfl [vmem:[#allocation1 + $0x18] sm:$0xff pattern:$0x75316420]
  %v1166 = vld.sshfl [vmem:[#allocation1 + $0x20] sm:$0xff pattern:$0x75316420]
  %v1167 = vld.sshfl [vmem:[#allocation1 + $0x28] sm:$0xff pattern:$0x75316420]
  %v1168 = vld.sshfl [vmem:[#allocation1 + $0x30] sm:$0xff pattern:$0x75316420]
  %v1169 = vld.sshfl [vmem:[#allocation1 + $0x38] sm:$0xff pattern:$0x75316420]
  %1170 = vst [vmem:[#allocation1] ss:$2 sm:$0xff] %v21
  %1171 = vst [vmem:[%s1156] ss:$2 sm:$0xff] %v22
  %1172 = vst [vmem:[%s1158] ss:$2 sm:$0xff] %v23
  %1173 = vst [vmem:[%s1160] ss:$2 sm:$0xff] %v24
  %v1174 = vld.sshfl [vmem:[#allocation1] sm:$0xff pattern:$0x75316420]
  %v1175 = vld.sshfl [vmem:[#allocation1 + $0x8] sm:$0xff pattern:$0x75316420]
  %v1176 = vld.sshfl [vmem:[#allocation1 + $0x10] sm:$0xff pattern:$0x75316420]
  %v1177 = vld.sshfl [vmem:[#allocation1 + $0x18] sm:$0xff pattern:$0x75316420]
  %v1178 = vld.sshfl [vmem:[#allocation1 + $0x20] sm:$0xff pattern:$0x75316420]
  %v1179 = vld.sshfl [vmem:[#allocation1 + $0x28] sm:$0xff pattern:$0x75316420]
  %v1180 = vld.sshfl [vmem:[#allocation1 + $0x30] sm:$0xff pattern:$0x75316420]
  %v1181 = vld.sshfl [vmem:[#allocation1 + $0x38] sm:$0xff pattern:$0x75316420]
  %v1214 = vrot.slane %v671, 4
  %v1215 = vrot.slane %v672, 4
  %v1216 = vrot.slane %v673, 4
  %v1217 = vrot.slane %v674, 4
  %v1218 = vrot.slane %v675, 4
  %v1219 = vrot.slane %v676, 4
  %v1220 = vrot.slane %v677, 4
  %v1221 = vrot.slane %v678, 4
  %v1222 = vrot.slane %v679, 4
  %v1223 = vrot.slane %v680, 4
  %v1224 = vrot.slane %v681, 4
  %v1225 = vrot.slane %v682, 4
  %v1226 = vrot.slane %v683, 4
  %v1227 = vrot.slane %v684, 4
  %v1228 = vrot.slane %v685, 4
  %v1229 = vrot.slane %v686, 4
  %v1262 = vrot.slane %v919, 4
  %v1263 = vrot.slane %v920, 4
  %v1264 = vrot.slane %v921, 4
  %v1265 = vrot.slane %v922, 4
  %v1266 = vrot.slane %v923, 4
  %v1267 = vrot.slane %v924, 4
  %v1268 = vrot.slane %v925, 4
  %v1269 = vrot.slane %v926, 4
  %v1270 = vrot.slane %v927, 4
  %v1271 = vrot.slane %v928, 4
  %v1272 = vrot.slane %v929, 4
  %v1273 = vrot.slane %v930, 4
  %v1274 = vrot.slane %v931, 4
  %v1275 = vrot.slane %v932, 4
  %v1276 = vrot.slane %v933, 4
  %v1277 = vrot.slane %v934, 4
  %vm1294 = vcmask 1043456
  %v1295 = vsel %vm1294, %v175, %v1075
  %v1296 = vsel %vm1294, %v176, %v1076
  %v1297 = vsel %vm1294, %v177, %v1077
  %v1298 = vsel %vm1294, %v178, %v1078
  %v1299 = vsel %vm1294, %v179, %v1079
  %v1300 = vsel %vm1294, %v180, %v1080
  %v1301 = vsel %vm1294, %v181, %v1081
  %v1302 = vsel %vm1294, %v182, %v1082
  %v1303 = vsel %vm1294, %v183, %v1083
  %v1304 = vsel %vm1294, %v184, %v1084
  %v1305 = vsel %vm1294, %v185, %v1085
  %v1306 = vsel %vm1294, %v186, %v1086
  %v1307 = vsel %vm1294, %v187, %v1087
  %v1308 = vsel %vm1294, %v188, %v1088
  %v1309 = vsel %vm1294, %v189, %v1089
  %v1310 = vsel %vm1294, %v190, %v1090
  %v1311 = vsel %vm1294, %v423, %v1123
  %v1312 = vsel %vm1294, %v424, %v1124
  %v1313 = vsel %vm1294, %v425, %v1125
  %v1314 = vsel %vm1294, %v426, %v1126
  %v1315 = vsel %vm1294, %v427, %v1127
  %v1316 = vsel %vm1294, %v428, %v1128
  %v1317 = vsel %vm1294, %v429, %v1129
  %v1318 = vsel %vm1294, %v430, %v1130
  %v1319 = vsel %vm1294, %v431, %v1131
  %v1320 = vsel %vm1294, %v432, %v1132
  %v1321 = vsel %vm1294, %v433, %v1133
  %v1322 = vsel %vm1294, %v434, %v1134
  %v1323 = vsel %vm1294, %v435, %v1135
  %v1324 = vsel %vm1294, %v436, %v1136
  %v1325 = vsel %vm1294, %v437, %v1137
  %v1326 = vsel %vm1294, %v438, %v1138
  %v1327 = vsel %vm1294, %v1162, %v1214
  %v1328 = vsel %vm1294, %v1163, %v1215
  %v1329 = vsel %vm1294, %v1164, %v1216
  %v1330 = vsel %vm1294, %v1165, %v1217
  %v1331 = vsel %vm1294, %v1166, %v1218
  %v1332 = vsel %vm1294, %v1167, %v1219
  %v1333 = vsel %vm1294, %v1168, %v1220
  %v1334 = vsel %vm1294, %v1169, %v1221
  %v1335 = vsel %vm1294, %v1174, %v1222
  %v1336 = vsel %vm1294, %v1175, %v1223
  %v1337 = vsel %vm1294, %v1176, %v1224
  %v1338 = vsel %vm1294, %v1177, %v1225
  %v1339 = vsel %vm1294, %v1178, %v1226
  %v1340 = vsel %vm1294, %v1179, %v1227
  %v1341 = vsel %vm1294, %v1180, %v1228
  %v1342 = vsel %vm1294, %v1181, %v1229
  %v1343 = vsel %vm1294, %v795, %v1262
  %v1344 = vsel %vm1294, %v796, %v1263
  %v1345 = vsel %vm1294, %v797, %v1264
  %v1346 = vsel %vm1294, %v798, %v1265
  %v1347 = vsel %vm1294, %v799, %v1266
  %v1348 = vsel %vm1294, %v800, %v1267
  %v1349 = vsel %vm1294, %v801, %v1268
  %v1350 = vsel %vm1294, %v802, %v1269
  %v1351 = vsel %vm1294, %v803, %v1270
  %v1352 = vsel %vm1294, %v804, %v1271
  %v1353 = vsel %vm1294, %v805, %v1272
  %v1354 = vsel %vm1294, %v806, %v1273
  %v1355 = vsel %vm1294, %v807, %v1274
  %v1356 = vsel %vm1294, %v808, %v1275
  %v1357 = vsel %vm1294, %v809, %v1276
  %v1358 = vsel %vm1294, %v810, %v1277
  %v1359 = vld [vmem:[%s2] sm:$0xff]
  %v1360 = vld [vmem:[%s3] sm:$0xff]
  %1362 = vset.pattern.permute.xlu0 0
  %1363 = vperm.xlu0 %1362, %v1360
  %v1364 = vpop.permute.xlu0 %1363
  %vm1366 = vcmask 293888
  %v1368 = vsel %vm1366, %v1359, 0
  %v1371 = vsel %vm1294, %v1043, 0
  %v1374 = vsel %vm1294, %v1044, 0
  %v1377 = vsel %vm1294, %v1045, 0
  %v1380 = vsel %vm1294, %v1046, 0
  %v1383 = vsel %vm1294, %v1047, 0
  %v1386 = vsel %vm1294, %v1048, 0
  %v1389 = vsel %vm1294, %v1049, 0
  %v1392 = vsel %vm1294, %v1050, 0
  %v1395 = vsel %vm1294, %v1051, 0
  %v1398 = vsel %vm1294, %v1052, 0
  %v1401 = vsel %vm1294, %v1053, 0
  %v1404 = vsel %vm1294, %v1054, 0
  %v1407 = vsel %vm1294, %v1055, 0
  %v1410 = vsel %vm1294, %v1056, 0
  %v1413 = vsel %vm1294, %v1057, 0
  %v1416 = vsel %vm1294, %v1058, 0
  %1418 = vmatpush.msra.mxu0 0.0
  %1419 = vmatpush.msra.mxu0 0.0
  %1420 = vmatpush.msra.mxu0 0.0
  %1421 = vmatpush.msra.mxu0 0.0
  %1422 = vmatpush.msra.mxu0 0.0
  %1423 = vmatpush.msra.mxu0 0.0
  %1424 = vmatpush.msra.mxu0 0.0
  %1425 = vmatpush.msra.mxu0 0.0
  %1426 = vmatpush.msra.mxu0 0.0
  %1427 = vmatpush.msra.mxu0 0.0
  %1428 = vmatpush.msra.mxu0 0.0
  %1429 = vmatpush.msra.mxu0 %v1371
  %1430 = vmatpush.msra.mxu0 %v1343
  %1431 = vmatpush.msra.mxu0 %v1327
  %1432 = vmatpush.msra.mxu0 %v1311
  %1433 = vmatpush.msra.mxu0 %v1295
  %1434 = vmatmul.f32.gmra.mxu0 %v1368
  %v1435 = vpop.f32.mrf.mxu0
  %v1436 = vadd.f32 %v1364, %v1435
  %1437 = vdwg.mxu0
  %1438 = vmatpush.msra.mxu0 0.0
  %1439 = vmatpush.msra.mxu0 0.0
  %1440 = vmatpush.msra.mxu0 0.0
  %1441 = vmatpush.msra.mxu0 0.0
  %1442 = vmatpush.msra.mxu0 0.0
  %1443 = vmatpush.msra.mxu0 0.0
  %1444 = vmatpush.msra.mxu0 0.0
  %1445 = vmatpush.msra.mxu0 0.0
  %1446 = vmatpush.msra.mxu0 0.0
  %1447 = vmatpush.msra.mxu0 0.0
  %1448 = vmatpush.msra.mxu0 0.0
  %1449 = vmatpush.msra.mxu0 %v1374
  %1450 = vmatpush.msra.mxu0 %v1344
  %1451 = vmatpush.msra.mxu0 %v1328
  %1452 = vmatpush.msra.mxu0 %v1312
  %1453 = vmatpush.msra.mxu0 %v1296
  %1454 = vmatmul.f32.gmra.mxu0 %v1368
  %v1455 = vpop.f32.mrf.mxu0
  %v1456 = vadd.f32 %v1364, %v1455
  %1457 = vdwg.mxu0
  %1458 = vmatpush.msra.mxu0 0.0
  %1459 = vmatpush.msra.mxu0 0.0
  %1460 = vmatpush.msra.mxu0 0.0
  %1461 = vmatpush.msra.mxu0 0.0
  %1462 = vmatpush.msra.mxu0 0.0
  %1463 = vmatpush.msra.mxu0 0.0
  %1464 = vmatpush.msra.mxu0 0.0
  %1465 = vmatpush.msra.mxu0 0.0
  %1466 = vmatpush.msra.mxu0 0.0
  %1467 = vmatpush.msra.mxu0 0.0
  %1468 = vmatpush.msra.mxu0 0.0
  %1469 = vmatpush.msra.mxu0 %v1377
  %1470 = vmatpush.msra.mxu0 %v1345
  %1471 = vmatpush.msra.mxu0 %v1329
  %1472 = vmatpush.msra.mxu0 %v1313
  %1473 = vmatpush.msra.mxu0 %v1297
  %1474 = vmatmul.f32.gmra.mxu0 %v1368
  %v1475 = vpop.f32.mrf.mxu0
  %v1476 = vadd.f32 %v1364, %v1475
  %1477 = vdwg.mxu0
  %1478 = vmatpush.msra.mxu0 0.0
  %1479 = vmatpush.msra.mxu0 0.0
  %1480 = vmatpush.msra.mxu0 0.0
  %1481 = vmatpush.msra.mxu0 0.0
  %1482 = vmatpush.msra.mxu0 0.0
  %1483 = vmatpush.msra.mxu0 0.0
  %1484 = vmatpush.msra.mxu0 0.0
  %1485 = vmatpush.msra.mxu0 0.0
  %1486 = vmatpush.msra.mxu0 0.0
  %1487 = vmatpush.msra.mxu0 0.0
  %1488 = vmatpush.msra.mxu0 0.0
  %1489 = vmatpush.msra.mxu0 %v1380
  %1490 = vmatpush.msra.mxu0 %v1346
  %1491 = vmatpush.msra.mxu0 %v1330
  %1492 = vmatpush.msra.mxu0 %v1314
  %1493 = vmatpush.msra.mxu0 %v1298
  %1494 = vmatmul.f32.gmra.mxu0 %v1368
  %v1495 = vpop.f32.mrf.mxu0
  %v1496 = vadd.f32 %v1364, %v1495
  %1497 = vdwg.mxu0
  %1498 = vmatpush.msra.mxu0 0.0
  %1499 = vmatpush.msra.mxu0 0.0
  %1500 = vmatpush.msra.mxu0 0.0
  %1501 = vmatpush.msra.mxu0 0.0
  %1502 = vmatpush.msra.mxu0 0.0
  %1503 = vmatpush.msra.mxu0 0.0
  %1504 = vmatpush.msra.mxu0 0.0
  %1505 = vmatpush.msra.mxu0 0.0
  %1506 = vmatpush.msra.mxu0 0.0
  %1507 = vmatpush.msra.mxu0 0.0
  %1508 = vmatpush.msra.mxu0 0.0
  %1509 = vmatpush.msra.mxu0 %v1383
  %1510 = vmatpush.msra.mxu0 %v1347
  %1511 = vmatpush.msra.mxu0 %v1331
  %1512 = vmatpush.msra.mxu0 %v1315
  %1513 = vmatpush.msra.mxu0 %v1299
  %1514 = vmatmul.f32.gmra.mxu0 %v1368
  %v1515 = vpop.f32.mrf.mxu0
  %v1516 = vadd.f32 %v1364, %v1515
  %1517 = vdwg.mxu0
  %1518 = vmatpush.msra.mxu0 0.0
  %1519 = vmatpush.msra.mxu0 0.0
  %1520 = vmatpush.msra.mxu0 0.0
  %1521 = vmatpush.msra.mxu0 0.0
  %1522 = vmatpush.msra.mxu0 0.0
  %1523 = vmatpush.msra.mxu0 0.0
  %1524 = vmatpush.msra.mxu0 0.0
  %1525 = vmatpush.msra.mxu0 0.0
  %1526 = vmatpush.msra.mxu0 0.0
  %1527 = vmatpush.msra.mxu0 0.0
  %1528 = vmatpush.msra.mxu0 0.0
  %1529 = vmatpush.msra.mxu0 %v1386
  %1530 = vmatpush.msra.mxu0 %v1348
  %1531 = vmatpush.msra.mxu0 %v1332
  %1532 = vmatpush.msra.mxu0 %v1316
  %1533 = vmatpush.msra.mxu0 %v1300
  %1534 = vmatmul.f32.gmra.mxu0 %v1368
  %v1535 = vpop.f32.mrf.mxu0
  %v1536 = vadd.f32 %v1364, %v1535
  %1537 = vdwg.mxu0
  %1538 = vmatpush.msra.mxu0 0.0
  %1539 = vmatpush.msra.mxu0 0.0
  %1540 = vmatpush.msra.mxu0 0.0
  %1541 = vmatpush.msra.mxu0 0.0
  %1542 = vmatpush.msra.mxu0 0.0
  %1543 = vmatpush.msra.mxu0 0.0
  %1544 = vmatpush.msra.mxu0 0.0
  %1545 = vmatpush.msra.mxu0 0.0
  %1546 = vmatpush.msra.mxu0 0.0
  %1547 = vmatpush.msra.mxu0 0.0
  %1548 = vmatpush.msra.mxu0 0.0
  %1549 = vmatpush.msra.mxu0 %v1389
  %1550 = vmatpush.msra.mxu0 %v1349
  %1551 = vmatpush.msra.mxu0 %v1333
  %1552 = vmatpush.msra.mxu0 %v1317
  %1553 = vmatpush.msra.mxu0 %v1301
  %1554 = vmatmul.f32.gmra.mxu0 %v1368
  %v1555 = vpop.f32.mrf.mxu0
  %v1556 = vadd.f32 %v1364, %v1555
  %1557 = vdwg.mxu0
  %1558 = vmatpush.msra.mxu0 0.0
  %1559 = vmatpush.msra.mxu0 0.0
  %1560 = vmatpush.msra.mxu0 0.0
  %1561 = vmatpush.msra.mxu0 0.0
  %1562 = vmatpush.msra.mxu0 0.0
  %1563 = vmatpush.msra.mxu0 0.0
  %1564 = vmatpush.msra.mxu0 0.0
  %1565 = vmatpush.msra.mxu0 0.0
  %1566 = vmatpush.msra.mxu0 0.0
  %1567 = vmatpush.msra.mxu0 0.0
  %1568 = vmatpush.msra.mxu0 0.0
  %1569 = vmatpush.msra.mxu0 %v1392
  %1570 = vmatpush.msra.mxu0 %v1350
  %1571 = vmatpush.msra.mxu0 %v1334
  %1572 = vmatpush.msra.mxu0 %v1318
  %1573 = vmatpush.msra.mxu0 %v1302
  %1574 = vmatmul.f32.gmra.mxu0 %v1368
  %v1575 = vpop.f32.mrf.mxu0
  %v1576 = vadd.f32 %v1364, %v1575
  %1577 = vdwg.mxu0
  %1578 = vmatpush.msra.mxu0 0.0
  %1579 = vmatpush.msra.mxu0 0.0
  %1580 = vmatpush.msra.mxu0 0.0
  %1581 = vmatpush.msra.mxu0 0.0
  %1582 = vmatpush.msra.mxu0 0.0
  %1583 = vmatpush.msra.mxu0 0.0
  %1584 = vmatpush.msra.mxu0 0.0
  %1585 = vmatpush.msra.mxu0 0.0
  %1586 = vmatpush.msra.mxu0 0.0
  %1587 = vmatpush.msra.mxu0 0.0
  %1588 = vmatpush.msra.mxu0 0.0
  %1589 = vmatpush.msra.mxu0 %v1395
  %1590 = vmatpush.msra.mxu0 %v1351
  %1591 = vmatpush.msra.mxu0 %v1335
  %1592 = vmatpush.msra.mxu0 %v1319
  %1593 = vmatpush.msra.mxu0 %v1303
  %1594 = vmatmul.f32.gmra.mxu0 %v1368
  %v1595 = vpop.f32.mrf.mxu0
  %v1596 = vadd.f32 %v1364, %v1595
  %1597 = vdwg.mxu0
  %1598 = vmatpush.msra.mxu0 0.0
  %1599 = vmatpush.msra.mxu0 0.0
  %1600 = vmatpush.msra.mxu0 0.0
  %1601 = vmatpush.msra.mxu0 0.0
  %1602 = vmatpush.msra.mxu0 0.0
  %1603 = vmatpush.msra.mxu0 0.0
  %1604 = vmatpush.msra.mxu0 0.0
  %1605 = vmatpush.msra.mxu0 0.0
  %1606 = vmatpush.msra.mxu0 0.0
  %1607 = vmatpush.msra.mxu0 0.0
  %1608 = vmatpush.msra.mxu0 0.0
  %1609 = vmatpush.msra.mxu0 %v1398
  %1610 = vmatpush.msra.mxu0 %v1352
  %1611 = vmatpush.msra.mxu0 %v1336
  %1612 = vmatpush.msra.mxu0 %v1320
  %1613 = vmatpush.msra.mxu0 %v1304
  %1614 = vmatmul.f32.gmra.mxu0 %v1368
  %v1615 = vpop.f32.mrf.mxu0
  %v1616 = vadd.f32 %v1364, %v1615
  %1617 = vdwg.mxu0
  %1618 = vmatpush.msra.mxu0 0.0
  %1619 = vmatpush.msra.mxu0 0.0
  %1620 = vmatpush.msra.mxu0 0.0
  %1621 = vmatpush.msra.mxu0 0.0
  %1622 = vmatpush.msra.mxu0 0.0
  %1623 = vmatpush.msra.mxu0 0.0
  %1624 = vmatpush.msra.mxu0 0.0
  %1625 = vmatpush.msra.mxu0 0.0
  %1626 = vmatpush.msra.mxu0 0.0
  %1627 = vmatpush.msra.mxu0 0.0
  %1628 = vmatpush.msra.mxu0 0.0
  %1629 = vmatpush.msra.mxu0 %v1401
  %1630 = vmatpush.msra.mxu0 %v1353
  %1631 = vmatpush.msra.mxu0 %v1337
  %1632 = vmatpush.msra.mxu0 %v1321
  %1633 = vmatpush.msra.mxu0 %v1305
  %1634 = vmatmul.f32.gmra.mxu0 %v1368
  %v1635 = vpop.f32.mrf.mxu0
  %v1636 = vadd.f32 %v1364, %v1635
  %1637 = vdwg.mxu0
  %1638 = vmatpush.msra.mxu0 0.0
  %1639 = vmatpush.msra.mxu0 0.0
  %1640 = vmatpush.msra.mxu0 0.0
  %1641 = vmatpush.msra.mxu0 0.0
  %1642 = vmatpush.msra.mxu0 0.0
  %1643 = vmatpush.msra.mxu0 0.0
  %1644 = vmatpush.msra.mxu0 0.0
  %1645 = vmatpush.msra.mxu0 0.0
  %1646 = vmatpush.msra.mxu0 0.0
  %1647 = vmatpush.msra.mxu0 0.0
  %1648 = vmatpush.msra.mxu0 0.0
  %1649 = vmatpush.msra.mxu0 %v1404
  %1650 = vmatpush.msra.mxu0 %v1354
  %1651 = vmatpush.msra.mxu0 %v1338
  %1652 = vmatpush.msra.mxu0 %v1322
  %1653 = vmatpush.msra.mxu0 %v1306
  %1654 = vmatmul.f32.gmra.mxu0 %v1368
  %v1655 = vpop.f32.mrf.mxu0
  %v1656 = vadd.f32 %v1364, %v1655
  %1657 = vdwg.mxu0
  %1658 = vmatpush.msra.mxu0 0.0
  %1659 = vmatpush.msra.mxu0 0.0
  %1660 = vmatpush.msra.mxu0 0.0
  %1661 = vmatpush.msra.mxu0 0.0
  %1662 = vmatpush.msra.mxu0 0.0
  %1663 = vmatpush.msra.mxu0 0.0
  %1664 = vmatpush.msra.mxu0 0.0
  %1665 = vmatpush.msra.mxu0 0.0
  %1666 = vmatpush.msra.mxu0 0.0
  %1667 = vmatpush.msra.mxu0 0.0
  %1668 = vmatpush.msra.mxu0 0.0
  %1669 = vmatpush.msra.mxu0 %v1407
  %1670 = vmatpush.msra.mxu0 %v1355
  %1671 = vmatpush.msra.mxu0 %v1339
  %1672 = vmatpush.msra.mxu0 %v1323
  %1673 = vmatpush.msra.mxu0 %v1307
  %1674 = vmatmul.f32.gmra.mxu0 %v1368
  %v1675 = vpop.f32.mrf.mxu0
  %v1676 = vadd.f32 %v1364, %v1675
  %1677 = vdwg.mxu0
  %1678 = vmatpush.msra.mxu0 0.0
  %1679 = vmatpush.msra.mxu0 0.0
  %1680 = vmatpush.msra.mxu0 0.0
  %1681 = vmatpush.msra.mxu0 0.0
  %1682 = vmatpush.msra.mxu0 0.0
  %1683 = vmatpush.msra.mxu0 0.0
  %1684 = vmatpush.msra.mxu0 0.0
  %1685 = vmatpush.msra.mxu0 0.0
  %1686 = vmatpush.msra.mxu0 0.0
  %1687 = vmatpush.msra.mxu0 0.0
  %1688 = vmatpush.msra.mxu0 0.0
  %1689 = vmatpush.msra.mxu0 %v1410
  %1690 = vmatpush.msra.mxu0 %v1356
  %1691 = vmatpush.msra.mxu0 %v1340
  %1692 = vmatpush.msra.mxu0 %v1324
  %1693 = vmatpush.msra.mxu0 %v1308
  %1694 = vmatmul.f32.gmra.mxu0 %v1368
  %v1695 = vpop.f32.mrf.mxu0
  %v1696 = vadd.f32 %v1364, %v1695
  %1697 = vdwg.mxu0
  %1698 = vmatpush.msra.mxu0 0.0
  %1699 = vmatpush.msra.mxu0 0.0
  %1700 = vmatpush.msra.mxu0 0.0
  %1701 = vmatpush.msra.mxu0 0.0
  %1702 = vmatpush.msra.mxu0 0.0
  %1703 = vmatpush.msra.mxu0 0.0
  %1704 = vmatpush.msra.mxu0 0.0
  %1705 = vmatpush.msra.mxu0 0.0
  %1706 = vmatpush.msra.mxu0 0.0
  %1707 = vmatpush.msra.mxu0 0.0
  %1708 = vmatpush.msra.mxu0 0.0
  %1709 = vmatpush.msra.mxu0 %v1413
  %1710 = vmatpush.msra.mxu0 %v1357
  %1711 = vmatpush.msra.mxu0 %v1341
  %1712 = vmatpush.msra.mxu0 %v1325
  %1713 = vmatpush.msra.mxu0 %v1309
  %1714 = vmatmul.f32.gmra.mxu0 %v1368
  %v1715 = vpop.f32.mrf.mxu0
  %v1716 = vadd.f32 %v1364, %v1715
  %1717 = vdwg.mxu0
  %1718 = vmatpush.msra.mxu0 0.0
  %1719 = vmatpush.msra.mxu0 0.0
  %1720 = vmatpush.msra.mxu0 0.0
  %1721 = vmatpush.msra.mxu0 0.0
  %1722 = vmatpush.msra.mxu0 0.0
  %1723 = vmatpush.msra.mxu0 0.0
  %1724 = vmatpush.msra.mxu0 0.0
  %1725 = vmatpush.msra.mxu0 0.0
  %1726 = vmatpush.msra.mxu0 0.0
  %1727 = vmatpush.msra.mxu0 0.0
  %1728 = vmatpush.msra.mxu0 0.0
  %1729 = vmatpush.msra.mxu0 %v1416
  %1730 = vmatpush.msra.mxu0 %v1358
  %1731 = vmatpush.msra.mxu0 %v1342
  %1732 = vmatpush.msra.mxu0 %v1326
  %1733 = vmatpush.msra.mxu0 %v1310
  %1734 = vmatmul.f32.gmra.mxu0 %v1368
  %v1735 = vpop.f32.mrf.mxu0
  %v1736 = vadd.f32 %v1364, %v1735
  %1737 = vdwg.mxu0
  %v1738 = vmax.f32 %v1436, 0.0
  %v1739 = vmax.f32 %v1456, 0.0
  %v1740 = vmax.f32 %v1476, 0.0
  %v1741 = vmax.f32 %v1496, 0.0
  %v1742 = vmax.f32 %v1516, 0.0
  %v1743 = vmax.f32 %v1536, 0.0
  %v1744 = vmax.f32 %v1556, 0.0
  %v1745 = vmax.f32 %v1576, 0.0
  %v1746 = vmax.f32 %v1596, 0.0
  %v1747 = vmax.f32 %v1616, 0.0
  %v1748 = vmax.f32 %v1636, 0.0
  %v1749 = vmax.f32 %v1656, 0.0
  %v1750 = vmax.f32 %v1676, 0.0
  %v1751 = vmax.f32 %v1696, 0.0
  %v1752 = vmax.f32 %v1716, 0.0
  %v1753 = vmax.f32 %v1736, 0.0
  %1754 = vst [vmem:[%s4] sm:$0xff] %v1738
  %1755 = vst [vmem:[%s4 + $0x8] sm:$0xff] %v1739
  %1756 = vst [vmem:[%s4 + $0x10] sm:$0xff] %v1740
  %1757 = vst [vmem:[%s4 + $0x18] sm:$0xff] %v1741
  %1758 = vst [vmem:[%s4 + $0x20] sm:$0xff] %v1742
  %1759 = vst [vmem:[%s4 + $0x28] sm:$0xff] %v1743
  %1760 = vst [vmem:[%s4 + $0x30] sm:$0xff] %v1744
  %1761 = vst [vmem:[%s4 + $0x38] sm:$0xff] %v1745
  %1762 = vst [vmem:[%s4 + $0x40] sm:$0xff] %v1746
  %1763 = vst [vmem:[%s4 + $0x48] sm:$0xff] %v1747
  %1764 = vst [vmem:[%s4 + $0x50] sm:$0xff] %v1748
  %1765 = vst [vmem:[%s4 + $0x58] sm:$0xff] %v1749
  %1766 = vst [vmem:[%s4 + $0x60] sm:$0xff] %v1750
  %1767 = vst [vmem:[%s4 + $0x68] sm:$0xff] %v1751
  %1768 = vst [vmem:[%s4 + $0x70] sm:$0xff] %v1752
  %1769 = vst [vmem:[%s4 + $0x78] sm:$0xff] %v1753
  // Predicated region
  $region18: #{bio_forward.2} parent=0 // pred_check
    _
  $region19: #{bio_forward.2} parent=0 // pred_check_branch
    %1771 = sbr.rel (0) target = $region21
  $region20: #{bio_forward.2} parent=0 // pred_region
    _
  $region21: #{bio_forward.2} parent=0 // pred_fallthru
    _
  // Predicated region
  $region22: #{bio_forward.2} parent=0 // pred_check
    _
  $region23: #{bio_forward.2} parent=0 // pred_check_branch
    %1773 = sbr.rel (0) target = $region25
  $region24: #{bio_forward.2} parent=0 // pred_region
    _
  $region25: #{bio_forward.2} parent=0 // pred_fallthru
    _

</llo_original>
